<compile_context>
chip_gen: v7x
topology: tpu7x:2x2x1
jax: 0.10.0
libtpu: 0.0.40
codegen_flags: <defaults>
</compile_context>

<pallas_src>
import functools
import math

import jax
import jax.numpy as jnp
from jax import lax
from jax.experimental import pallas as pl
from jax.experimental.pallas import tpu as pltpu


def _round_up(x, m):
    return ((x + m - 1) // m) * m


def _physical_vmem_bytes():
    try:
        return int(pltpu.get_tpu_info().vmem_capacity_bytes)
    except Exception:
        return 64 * 1024 * 1024   # conservative default (v7x per-TC VMEM)


def _vmem_step_bytes(tile_sq, sk_p, dq_p, dk_p, dv_p, return_attn, use_bf16):
    """Rough per-step VMEM residency estimate (double-buffered I/O + scratch + temps)."""
    f32 = 4
    kvb = 2 if use_bf16 else 4
    est = 2 * tile_sq * dq_p * f32                                   # q tile (x2 buffers)
    est += 2 * sk_p * dk_p * f32                                     # keys block (x2 buffers)
    est += 2 * (dq_p * dk_p + dk_p * dk_p + dk_p * dv_p
                + 3 * max(dk_p, dv_p)) * f32                         # weights + biases
    est += 2 * tile_sq * dv_p * f32                                  # out tile (x2 buffers)
    if return_attn:
        est += 2 * tile_sq * sk_p * f32                              # attn tile (x2 buffers)
    est += (dk_p * sk_p + sk_p * dv_p) * kvb                         # k^T / v scratch
    est += 3 * tile_sq * sk_p * f32                                  # scores / exp temporaries
    return est


def _pick_tile_sq(sq, sk_p, dq_p, dk_p, dv_p, return_attn, use_bf16, budget):
    sq_aligned = _round_up(max(sq, 1), 8)
    for cand in (512, 256, 128, 64, 32, 16, 8):
        t = min(cand, sq_aligned)
        if _vmem_step_bytes(t, sk_p, dq_p, dk_p, dv_p, return_attn, use_bf16) <= budget:
            return t
    return min(8, sq_aligned)


def _attention_kernel(*refs, sk_valid, reuse_kv, return_attn, use_bf16):
    (q_ref, k_ref, wq_ref, bq_ref, wk_ref, bk_ref, wv_ref, bv_ref) = refs[:8]
    if return_attn:
        out_ref, attn_ref = refs[8], refs[9]
        kt_ref, v_ref = refs[10], refs[11]
    else:
        out_ref, attn_ref = refs[8], None
        kt_ref, v_ref = refs[9], refs[10]

    mxu = jnp.bfloat16 if use_bf16 else jnp.float32

    def project_kv():
        # K / V projections for the whole batch row; done once per batch (reuse_kv)
        # or per step (single-tile / B==1 fallback).
        k_in = k_ref[...]
        k = jnp.dot(k_in.astype(mxu), wk_ref[...].astype(mxu),
                    preferred_element_type=jnp.float32) + bk_ref[...]
        v = jnp.dot(k.astype(mxu), wv_ref[...].astype(mxu),
                    preferred_element_type=jnp.float32) + bv_ref[...]
        # One transpose per batch (XLU) so the per-tile scores matmul is a plain NN dot
        # against a resident (Dk, Sk) operand — no per-tile NT contraction / transpose.
        kt_ref[...] = k.T.astype(kt_ref.dtype)
        v_ref[...] = v.astype(v_ref.dtype)

    if reuse_kv:
        @pl.when(pl.program_id(1) == 0)
        def _():
            project_kv()
    else:
        project_kv()

    # Query projection for this Sq tile.
    q = jnp.dot(q_ref[...].astype(mxu), wq_ref[...].astype(mxu),
                preferred_element_type=jnp.float32) + bq_ref[...]

    # scores = q @ k^T as a plain NN matmul against the pre-transposed scratch.
    scores = jnp.dot(q.astype(mxu), kt_ref[...],
                     preferred_element_type=jnp.float32)              # (tile_sq, Sk_p)

    # Mask padded key columns before softmax (padded keys project to bk, not zero).
    sk_pad = scores.shape[-1]
    if sk_valid != sk_pad:
        col = lax.broadcasted_iota(jnp.int32, scores.shape, 1)
        scores = jnp.where(col < sk_valid, scores, jnp.float32(-1e30))

    # Numerically-stable softmax along the key axis.
    m = jnp.max(scores, axis=-1, keepdims=True)
    e = jnp.exp(scores - m)
    s = jnp.sum(e, axis=-1, keepdims=True)
    # Exact reciprocal in f32 mode keeps 1e-5 parity with the reference.
    attn = e * pl.reciprocal(s, approx=use_bf16)

    if return_attn:
        attn_ref[...] = attn.astype(attn_ref.dtype)
    out_ref[...] = jnp.dot(attn.astype(mxu), v_ref[...],
                           preferred_element_type=jnp.float32).astype(out_ref.dtype)


def attention_pallas(query, keys, params, *, tile_sq=None, return_attn=True, use_bf16=False):
    """query: (B, Sq, query_dim)  keys: (B, Sk, key_dim).

    params = (Wq^T, bq, Wk^T, bk, Wv^T, bv) with weights pre-transposed to (in, out)
    and biases shaped (1, out), matching PyTorch nn.Linear's x @ W.T + b.
    """
    B, Sq, Dq = query.shape
    _, Sk, Dk = keys.shape
    wq_t, bq, wk_t, bk, wv_t, bv = params
    Dv = wv_t.shape[1]

    # --- Lane-dense padding sizes ---------------------------------------------------
    Dq_p = _round_up(Dq, 128)
    Dk_p = _round_up(Dk, 128)
    Dv_p = _round_up(Dv, 128)
    Sk_p = _round_up(Sk, 128)

    phys_vmem = _physical_vmem_bytes()
    budget = (phys_vmem * 3) // 5            # leave headroom for compiler scratch / spill
    if tile_sq is None:
        tile_sq = _pick_tile_sq(Sq, Sk_p, Dq_p, Dk_p, Dv_p, return_attn, use_bf16, budget)
    else:
        tile_sq = max(8, _round_up(min(tile_sq, _round_up(Sq, 8)), 8))
    Sq_p = _round_up(Sq, tile_sq)
    n_sq_tiles = Sq_p // tile_sq

    est = _vmem_step_bytes(tile_sq, Sk_p, Dq_p, Dk_p, Dv_p, return_attn, use_bf16)
    vmem_limit = int(min((phys_vmem * 3) // 4, max(32 * 1024 * 1024, est * 2)))

    def _pad2(x, rows, cols):
        pr, pc = rows - x.shape[-2], cols - x.shape[-1]
        if pr == 0 and pc == 0:
            return x
        pads = [(0, 0)] * (x.ndim - 2) + [(0, pr), (0, pc)]
        return jnp.pad(x, pads)

    q_pad = _pad2(query, Sq_p, Dq_p)
    k_pad = _pad2(keys, Sk_p, Dk_p)
    wq_p = _pad2(wq_t, Dq_p, Dk_p)
    bq_p = _pad2(bq, 1, Dk_p)
    wk_p = _pad2(wk_t, Dk_p, Dk_p)
    bk_p = _pad2(bk, 1, Dk_p)
    wv_p = _pad2(wv_t, Dk_p, Dv_p)
    bv_p = _pad2(bv, 1, Dv_p)

    # Reuse K/V projections across Sq tiles when Sq spans more than one tile.
    # With B == 1 we instead keep both grid axes "parallel" so a 2-TC chip (v7x) can
    # still shard the Sq tiles; the redundant K/V recompute is the price.
    # TODO(synk): on 1-TC chips (v5e/v6e) reuse would also pay off for B == 1.
    reuse_kv = (n_sq_tiles > 1) and (B > 1)
    dim_sem = ("parallel", "arbitrary") if reuse_kv else ("parallel", "parallel")

    kv_dtype = jnp.bfloat16 if use_bf16 else jnp.float32

    kernel = functools.partial(_attention_kernel, sk_valid=Sk, reuse_kv=reuse_kv,
                               return_attn=return_attn, use_bf16=use_bf16)

    in_specs = [
        pl.BlockSpec((None, tile_sq, Dq_p), lambda b, i: (b, i, 0)),   # query tile
        pl.BlockSpec((None, Sk_p, Dk_p), lambda b, i: (b, 0, 0)),      # keys (full Sk per batch)
        pl.BlockSpec((Dq_p, Dk_p), lambda b, i: (0, 0)),               # Wq^T
        pl.BlockSpec((1, Dk_p), lambda b, i: (0, 0)),                  # bq
        pl.BlockSpec((Dk_p, Dk_p), lambda b, i: (0, 0)),               # Wk^T
        pl.BlockSpec((1, Dk_p), lambda b, i: (0, 0)),                  # bk
        pl.BlockSpec((Dk_p, Dv_p), lambda b, i: (0, 0)),               # Wv^T
        pl.BlockSpec((1, Dv_p), lambda b, i: (0, 0)),                  # bv
    ]

    out_spec_o = pl.BlockSpec((None, tile_sq, Dv_p), lambda b, i: (b, i, 0))
    if return_attn:
        out_shape = (jax.ShapeDtypeStruct((B, Sq_p, Dv_p), jnp.float32),
                     jax.ShapeDtypeStruct((B, Sq_p, Sk_p), jnp.float32))
        out_specs = [out_spec_o,
                     pl.BlockSpec((None, tile_sq, Sk_p), lambda b, i: (b, i, 0))]
    else:
        out_shape = jax.ShapeDtypeStruct((B, Sq_p, Dv_p), jnp.float32)
        out_specs = out_spec_o

    scratch_shapes = [
        pltpu.VMEM((Dk_p, Sk_p), kv_dtype),    # k^T, resident per batch
        pltpu.VMEM((Sk_p, Dv_p), kv_dtype),    # v,   resident per batch
    ]

    result = pl.pallas_call(
        kernel,
        out_shape=out_shape,
        grid_spec=pltpu.PrefetchScalarGridSpec(
            num_scalar_prefetch=0,
            grid=(B, n_sq_tiles),
            in_specs=in_specs,
            out_specs=out_specs,
            scratch_shapes=scratch_shapes,
        ),
        compiler_params=pltpu.CompilerParams(
            dimension_semantics=dim_sem,
            vmem_limit_bytes=vmem_limit,
        ),
    )(q_pad, k_pad, wq_p, bq_p, wk_p, bk_p, wv_p, bv_p)

    def _crop(x, s, d):
        if x.shape[1] == s and x.shape[2] == d:
            return x
        return x[:, :s, :d]

    if return_attn:
        out_p, attn_p = result
        return _crop(out_p, Sq, Dv), _crop(attn_p, Sq, Sk)
    return _crop(result, Sq, Dv)


def _init_linear(key, in_dim, out_dim):
    """Deterministic init matching nn.Linear's shapes: W (out, in), b (out,)."""
    kw, kb = jax.random.split(key)
    bound = 1.0 / math.sqrt(in_dim)
    w = jax.random.uniform(kw, (out_dim, in_dim), jnp.float32, -bound, bound)
    b = jax.random.uniform(kb, (out_dim,), jnp.float32, -bound, bound)
    return w, b


def _reference(query, keys, raw_params):
    """Pure-JAX reference mirroring the PyTorch forward."""
    (wq, bq), (wk, bk), (wv, bv) = raw_params
    q = query @ wq.T + bq
    k = keys @ wk.T + bk
    scores = q @ jnp.swapaxes(k, -2, -1)
    attn = jax.nn.softmax(scores, axis=-1)
    out = attn @ (k @ wv.T + bv)
    return out, attn


if __name__ == "__main__":
    def run_case(B, Sq, Sk, query_dim, key_dim, value_dim, seed, tile_sq=None):
        root = jax.random.PRNGKey(seed)
        k_q, k_k, k_qw, k_kw, k_vw = jax.random.split(root, 5)
        query = jax.random.normal(k_q, (B, Sq, query_dim), jnp.float32)
        keys = jax.random.normal(k_k, (B, Sk, key_dim), jnp.float32)
        wq, bq = _init_linear(k_qw, query_dim, key_dim)
        wk, bk = _init_linear(k_kw, key_dim, key_dim)
        wv, bv = _init_linear(k_vw, key_dim, value_dim)
        # Kernel-side params: transposed weights (in, out) and biases as (1, out) rows.
        params = (wq.T, bq[None, :], wk.T, bk[None, :], wv.T, bv[None, :])

        out, attn = attention_pallas(query, keys, params, tile_sq=tile_sq)
        out = jax.block_until_ready(out)
        attn = jax.block_until_ready(attn)

        ref_out, ref_attn = _reference(query, keys, ((wq, bq), (wk, bk), (wv, bv)))
        assert out.shape == (B, Sq, value_dim) and attn.shape == (B, Sq, Sk)
        assert jnp.allclose(out, ref_out, atol=1e-5, rtol=1e-5)
        assert jnp.allclose(attn, ref_attn, atol=1e-5, rtol=1e-5)

        # out-only path (no attention-weights writeback).
        out_only = attention_pallas(query, keys, params, tile_sq=tile_sq, return_attn=False)
        out_only = jax.block_until_ready(out_only)
        assert jnp.allclose(out_only, ref_out, atol=1e-5, rtol=1e-5)

    # Small, module-consistent shapes (single Sq tile; both grid axes parallel).
    run_case(B=2, Sq=8, Sk=8, query_dim=32, key_dim=32, value_dim=32, seed=0)
    # Multi-Sq-tile path with unaligned dims: exercises the per-batch K/V scratch reuse
    # (pl.when(i == 0) + "arbitrary" Sq axis) and the padding/masking/crop logic.
    run_case(B=2, Sq=24, Sk=16, query_dim=16, key_dim=48, value_dim=40, seed=1, tile_sq=8)

    print("KERNEL_OK")
</pallas_src>

<mosaic_0001>
module attributes {stable_mosaic.version = 11 : i64} {
  func.func @_attention_kernel(%arg0: i32, %arg1: i32, %arg2: memref<1x8x128xf32, #tpu.memory_space<vmem>>, %arg3: memref<1x128x128xf32, #tpu.memory_space<vmem>>, %arg4: memref<128x128xf32, #tpu.memory_space<vmem>>, %arg5: memref<1x128xf32, #tpu.memory_space<vmem>>, %arg6: memref<128x128xf32, #tpu.memory_space<vmem>>, %arg7: memref<1x128xf32, #tpu.memory_space<vmem>>, %arg8: memref<128x128xf32, #tpu.memory_space<vmem>>, %arg9: memref<1x128xf32, #tpu.memory_space<vmem>>, %arg10: memref<1x8x128xf32, #tpu.memory_space<vmem>>, %arg11: memref<1x8x128xf32, #tpu.memory_space<vmem>>, %arg12: memref<128x128xf32, #tpu.memory_space<vmem>>, %arg13: memref<128x128xf32, #tpu.memory_space<vmem>>) attributes {dimension_semantics = [#tpu.dimension_semantics<parallel>, #tpu.dimension_semantics<parallel>], iteration_bounds = array<i64: 2, 1>, scalar_prefetch = 0 : i64, scratch_operands = 2 : i64, tpu.core_type = #tpu.core_type<tc>, window_params = [{transform_indices = @transform_0, window_bounds = array<i64: 1, 8, 128>}, {transform_indices = @transform_1, window_bounds = array<i64: 1, 128, 128>}, {pipeline_mode = #tpu.pipeline_mode<synchronous>, transform_indices = @transform_2, window_bounds = array<i64: 128, 128>}, {pipeline_mode = #tpu.pipeline_mode<synchronous>, transform_indices = @transform_3, window_bounds = array<i64: 1, 128>}, {pipeline_mode = #tpu.pipeline_mode<synchronous>, transform_indices = @transform_4, window_bounds = array<i64: 128, 128>}, {pipeline_mode = #tpu.pipeline_mode<synchronous>, transform_indices = @transform_5, window_bounds = array<i64: 1, 128>}, {pipeline_mode = #tpu.pipeline_mode<synchronous>, transform_indices = @transform_6, window_bounds = array<i64: 128, 128>}, {pipeline_mode = #tpu.pipeline_mode<synchronous>, transform_indices = @transform_7, window_bounds = array<i64: 1, 128>}, {transform_indices = @transform_8, window_bounds = array<i64: 1, 8, 128>}, {transform_indices = @transform_9, window_bounds = array<i64: 1, 8, 128>}]} {
    %c0 = arith.constant 0 : index
    %c0_0 = arith.constant 0 : index
    %c0_1 = arith.constant 0 : index
    %0 = vector.load %arg3[%c0, %c0_0, %c0_1] : memref<1x128x128xf32, #tpu.memory_space<vmem>>, vector<1x128x128xf32>
    %1 = vector.shape_cast %0 : vector<1x128x128xf32> to vector<128x128xf32>
    %c0_2 = arith.constant 0 : index
    %c0_3 = arith.constant 0 : index
    %2 = vector.load %arg6[%c0_2, %c0_3] : memref<128x128xf32, #tpu.memory_space<vmem>>, vector<128x128xf32>
    %cst = arith.constant dense<0.000000e+00> : vector<128x128xf32>
    %3 = tpu.matmul %1, %2, %cst {dimension_numbers = #tpu.dot_dimension_numbers<[1], [0], [0], [1], [0, 0, 1, 1], [], []>} : vector<128x128xf32>, vector<128x128xf32>, vector<128x128xf32> -> vector<128x128xf32>
    %c0_4 = arith.constant 0 : index
    %c0_5 = arith.constant 0 : index
    %4 = vector.load %arg7[%c0_4, %c0_5] : memref<1x128xf32, #tpu.memory_space<vmem>>, vector<1x128xf32>
    %5 = vector.broadcast %4 : vector<1x128xf32> to vector<128x128xf32>
    %6 = arith.addf %3, %5 : vector<128x128xf32>
    %c0_6 = arith.constant 0 : index
    %c0_7 = arith.constant 0 : index
    %7 = vector.load %arg8[%c0_6, %c0_7] : memref<128x128xf32, #tpu.memory_space<vmem>>, vector<128x128xf32>
    %cst_8 = arith.constant dense<0.000000e+00> : vector<128x128xf32>
    %8 = tpu.matmul %6, %7, %cst_8 {dimension_numbers = #tpu.dot_dimension_numbers<[1], [0], [0], [1], [0, 0, 1, 1], [], []>} : vector<128x128xf32>, vector<128x128xf32>, vector<128x128xf32> -> vector<128x128xf32>
    %c0_9 = arith.constant 0 : index
    %c0_10 = arith.constant 0 : index
    %9 = vector.load %arg9[%c0_9, %c0_10] : memref<1x128xf32, #tpu.memory_space<vmem>>, vector<1x128xf32>
    %10 = vector.broadcast %9 : vector<1x128xf32> to vector<128x128xf32>
    %11 = arith.addf %8, %10 : vector<128x128xf32>
    %12 = tpu.transpose %6, [1, 0] : vector<128x128xf32> -> vector<128x128xf32>
    %c0_11 = arith.constant 0 : index
    %c0_12 = arith.constant 0 : index
    %13 = vector.load %arg12[%c0_11, %c0_12] : memref<128x128xf32, #tpu.memory_space<vmem>>, vector<128x128xf32>
    tpu.vector_store %arg12[%c0_11, %c0_12], %12 {strides = array<i32>} : memref<128x128xf32, #tpu.memory_space<vmem>>, vector<128x128xf32>,
    %c0_13 = arith.constant 0 : index
    %c0_14 = arith.constant 0 : index
    %14 = vector.load %arg13[%c0_13, %c0_14] : memref<128x128xf32, #tpu.memory_space<vmem>>, vector<128x128xf32>
    tpu.vector_store %arg13[%c0_13, %c0_14], %11 {strides = array<i32>} : memref<128x128xf32, #tpu.memory_space<vmem>>, vector<128x128xf32>,
    %c0_15 = arith.constant 0 : index
    %c0_16 = arith.constant 0 : index
    %c0_17 = arith.constant 0 : index
    %15 = vector.load %arg2[%c0_15, %c0_16, %c0_17] : memref<1x8x128xf32, #tpu.memory_space<vmem>>, vector<1x8x128xf32>
    %16 = vector.shape_cast %15 : vector<1x8x128xf32> to vector<8x128xf32>
    %c0_18 = arith.constant 0 : index
    %c0_19 = arith.constant 0 : index
    %17 = vector.load %arg4[%c0_18, %c0_19] : memref<128x128xf32, #tpu.memory_space<vmem>>, vector<128x128xf32>
    %cst_20 = arith.constant dense<0.000000e+00> : vector<8x128xf32>
    %18 = tpu.matmul %16, %17, %cst_20 {dimension_numbers = #tpu.dot_dimension_numbers<[1], [0], [0], [1], [0, 0, 1, 1], [], []>} : vector<8x128xf32>, vector<128x128xf32>, vector<8x128xf32> -> vector<8x128xf32>
    %c0_21 = arith.constant 0 : index
    %c0_22 = arith.constant 0 : index
    %19 = vector.load %arg5[%c0_21, %c0_22] : memref<1x128xf32, #tpu.memory_space<vmem>>, vector<1x128xf32>
    %20 = vector.broadcast %19 : vector<1x128xf32> to vector<8x128xf32>
    %21 = arith.addf %18, %20 : vector<8x128xf32>
    %c0_23 = arith.constant 0 : index
    %c0_24 = arith.constant 0 : index
    %22 = vector.load %arg12[%c0_23, %c0_24] : memref<128x128xf32, #tpu.memory_space<vmem>>, vector<128x128xf32>
    %cst_25 = arith.constant dense<0.000000e+00> : vector<8x128xf32>
    %23 = tpu.matmul %21, %22, %cst_25 {dimension_numbers = #tpu.dot_dimension_numbers<[1], [0], [0], [1], [0, 0, 1, 1], [], []>} : vector<8x128xf32>, vector<128x128xf32>, vector<8x128xf32> -> vector<8x128xf32>
    %24 = tpu.iota {dimensions = array<i32: 1>} : vector<8x128xi32>
    %c8_i32 = arith.constant 8 : i32
    %25 = vector.broadcast %c8_i32 : i32 to vector<8x128xi32>
    %26 = arith.cmpi slt, %24, %25 : vector<8x128xi32>
    %cst_26 = arith.constant -1.000000e+30 : f32
    %27 = vector.broadcast %cst_26 : f32 to vector<8x128xf32>
    %28 = arith.select %26, %23, %27 : vector<8x128xi1>, vector<8x128xf32>
    %cst_27 = arith.constant dense<0xFF800000> : vector<8xf32>
    %29 = vector.multi_reduction <maximumf>, %28, %cst_27 [1] : vector<8x128xf32> to vector<8xf32>
    %30 = vector.shape_cast %29 : vector<8xf32> to vector<8x1xf32>
    %31 = vector.broadcast %30 : vector<8x1xf32> to vector<8x128xf32>
    %32 = arith.subf %28, %31 : vector<8x128xf32>
    %33 = math.exp %32 : vector<8x128xf32>
    %cst_28 = arith.constant dense<0.000000e+00> : vector<8xf32>
    %34 = vector.multi_reduction <add>, %33, %cst_28 [1] : vector<8x128xf32> to vector<8xf32>
    %35 = vector.shape_cast %34 : vector<8xf32> to vector<8x1xf32>
    %36 = tpu.reciprocal %35 : vector<8x1xf32> -> vector<8x1xf32>
    %37 = vector.broadcast %36 : vector<8x1xf32> to vector<8x128xf32>
    %38 = arith.mulf %33, %37 : vector<8x128xf32>
    %c0_29 = arith.constant 0 : index
    %c0_30 = arith.constant 0 : index
    %c0_31 = arith.constant 0 : index
    %39 = vector.load %arg11[%c0_29, %c0_30, %c0_31] : memref<1x8x128xf32, #tpu.memory_space<vmem>>, vector<1x8x128xf32>
    %40 = vector.shape_cast %39 : vector<1x8x128xf32> to vector<8x128xf32>
    %41 = vector.shape_cast %38 : vector<8x128xf32> to vector<1x8x128xf32>
    tpu.vector_store %arg11[%c0_29, %c0_30, %c0_31], %41 {strides = array<i32>} : memref<1x8x128xf32, #tpu.memory_space<vmem>>, vector<1x8x128xf32>,
    %c0_32 = arith.constant 0 : index
    %c0_33 = arith.constant 0 : index
    %42 = vector.load %arg13[%c0_32, %c0_33] : memref<128x128xf32, #tpu.memory_space<vmem>>, vector<128x128xf32>
    %cst_34 = arith.constant dense<0.000000e+00> : vector<8x128xf32>
    %43 = tpu.matmul %38, %42, %cst_34 {dimension_numbers = #tpu.dot_dimension_numbers<[1], [0], [0], [1], [0, 0, 1, 1], [], []>} : vector<8x128xf32>, vector<128x128xf32>, vector<8x128xf32> -> vector<8x128xf32>
    %c0_35 = arith.constant 0 : index
    %c0_36 = arith.constant 0 : index
    %c0_37 = arith.constant 0 : index
    %44 = vector.load %arg10[%c0_35, %c0_36, %c0_37] : memref<1x8x128xf32, #tpu.memory_space<vmem>>, vector<1x8x128xf32>
    %45 = vector.shape_cast %44 : vector<1x8x128xf32> to vector<8x128xf32>
    %46 = vector.shape_cast %43 : vector<8x128xf32> to vector<1x8x128xf32>
    tpu.vector_store %arg10[%c0_35, %c0_36, %c0_37], %46 {strides = array<i32>} : memref<1x8x128xf32, #tpu.memory_space<vmem>>, vector<1x8x128xf32>,
    return
  }
  func.func @transform_0(%arg0: i32, %arg1: i32) -> (i32, i32, i32) {
    %c0_i32 = arith.constant 0 : i32
    %c0_i32_0 = arith.constant 0 : i32
    return %arg0, %arg1, %c0_i32 : i32, i32, i32
  }
  func.func @transform_1(%arg0: i32, %arg1: i32) -> (i32, i32, i32) {
    %c0_i32 = arith.constant 0 : i32
    %c0_i32_0 = arith.constant 0 : i32
    %c0_i32_1 = arith.constant 0 : i32
    return %arg0, %c0_i32, %c0_i32_0 : i32, i32, i32
  }
  func.func @transform_2(%arg0: i32, %arg1: i32) -> (i32, i32) {
    %c0_i32 = arith.constant 0 : i32
    %c0_i32_0 = arith.constant 0 : i32
    %c0_i32_1 = arith.constant 0 : i32
    return %c0_i32, %c0_i32_0 : i32, i32
  }
  func.func @transform_3(%arg0: i32, %arg1: i32) -> (i32, i32) {
    %c0_i32 = arith.constant 0 : i32
    %c0_i32_0 = arith.constant 0 : i32
    %c0_i32_1 = arith.constant 0 : i32
    return %c0_i32, %c0_i32_0 : i32, i32
  }
  func.func @transform_4(%arg0: i32, %arg1: i32) -> (i32, i32) {
    %c0_i32 = arith.constant 0 : i32
    %c0_i32_0 = arith.constant 0 : i32
    %c0_i32_1 = arith.constant 0 : i32
    return %c0_i32, %c0_i32_0 : i32, i32
  }
  func.func @transform_5(%arg0: i32, %arg1: i32) -> (i32, i32) {
    %c0_i32 = arith.constant 0 : i32
    %c0_i32_0 = arith.constant 0 : i32
    %c0_i32_1 = arith.constant 0 : i32
    return %c0_i32, %c0_i32_0 : i32, i32
  }
  func.func @transform_6(%arg0: i32, %arg1: i32) -> (i32, i32) {
    %c0_i32 = arith.constant 0 : i32
    %c0_i32_0 = arith.constant 0 : i32
    %c0_i32_1 = arith.constant 0 : i32
    return %c0_i32, %c0_i32_0 : i32, i32
  }
  func.func @transform_7(%arg0: i32, %arg1: i32) -> (i32, i32) {
    %c0_i32 = arith.constant 0 : i32
    %c0_i32_0 = arith.constant 0 : i32
    %c0_i32_1 = arith.constant 0 : i32
    return %c0_i32, %c0_i32_0 : i32, i32
  }
  func.func @transform_8(%arg0: i32, %arg1: i32) -> (i32, i32, i32) {
    %c0_i32 = arith.constant 0 : i32
    %c0_i32_0 = arith.constant 0 : i32
    return %arg0, %arg1, %c0_i32 : i32, i32, i32
  }
  func.func @transform_9(%arg0: i32, %arg1: i32) -> (i32, i32, i32) {
    %c0_i32 = arith.constant 0 : i32
    %c0_i32_0 = arith.constant 0 : i32
    return %arg0, %arg1, %c0_i32 : i32, i32, i32
  }
}

</mosaic_0001>

<llo_original>
// kernel: tpu_custom_call.1
$region0: #{tpu_custom_call.1}
  #allocation0 [shape = 'u32[]', space=smem, size = 0x4, offset = 0x4, fixed_abs, tag = 'smem constant byte address 0x4 - core index']
  #allocation1 [shape = 'u32[144,128]{1,0:T(1,128)}', space=vmem, size = 0x12000, scoped, tag = 'internal scratch']
  #allocation2 [shape = 'f32[128,128]{1,0:T(8,128)}', space=vmem, size = 0x10000, scoped, tag = 'scratch operand']
  #allocation3 [shape = 'f32[128,128]{1,0:T(8,128)}', space=vmem, size = 0x10000, scoped, tag = 'scratch operand']
  %s0 = inlined_call_operand.hbm [shape: f32[2,8,128], index: 0, kind: input, shape index: {}]
  %s1 = inlined_call_operand.hbm [shape: f32[2,128,128], index: 1, kind: input, shape index: {}]
  %s2 = inlined_call_operand.hbm [shape: f32[128,128], index: 2, kind: input, shape index: {}]
  %s3 = inlined_call_operand.vmem [shape: f32[1,128], index: 3, kind: input, shape index: {}]
  %s4 = inlined_call_operand.hbm [shape: f32[128,128], index: 4, kind: input, shape index: {}]
  %s5 = inlined_call_operand.vmem [shape: f32[1,128], index: 5, kind: input, shape index: {}]
  %s6 = inlined_call_operand.hbm [shape: f32[128,128], index: 6, kind: input, shape index: {}]
  %s7 = inlined_call_operand.vmem [shape: f32[1,128], index: 7, kind: input, shape index: {}]
  %s8 = inlined_call_operand.hbm [shape: f32[2,8,128], index: 8, kind: output, shape index: {0}]
  %s9 = inlined_call_operand.hbm [shape: f32[2,8,128], index: 9, kind: output, shape index: {1}]
  %10 = xla_tuple %s8, %s9
  %s11 = sld [smem:[#allocation0]]
  $region93: #{tpu_custom_call.1} parent=0
    _
  %s13 = ssub.s32 1, %s11
  %s14 = scalar_select 0, %s13, %s11
  $region1: #{tpu_custom_call.1} parent=0
    #allocation4 [shape = 'u8[8192]{0}', space=vmem, size = 0x2000, scoped, tag = 'input window, operand 0']
    #allocation5 [shape = 's32[2]{0}', space=sflag, size = 0x8, scoped, tag = 'scoped memory for tpu_custom_call.1']
    #allocation6 [shape = 's32[2]{0}', space=sflag, size = 0x8, scoped, tag = 'scoped memory for tpu_custom_call.1']
    #allocation7 [shape = 'u8[131072]{0}', space=vmem, size = 0x20000, scoped, tag = 'input window, operand 1']
    #allocation8 [shape = 's32[2]{0}', space=sflag, size = 0x8, scoped, tag = 'scoped memory for tpu_custom_call.1']
    #allocation9 [shape = 'u8[65536]{0}', space=vmem, size = 0x10000, scoped, tag = 'input window, operand 2, single buffered']
    #allocation10 [shape = 'u8[65536]{0}', space=vmem, size = 0x10000, scoped, tag = 'input window, operand 4, single buffered']
    #allocation11 [shape = 's32[1]{0}', space=sflag, size = 0x4, scoped, tag = 'scoped memory for tpu_custom_call.1']
    #allocation12 [shape = 'u8[65536]{0}', space=vmem, size = 0x10000, scoped, tag = 'input window, operand 6, single buffered']
    #allocation13 [shape = 'u8[8192]{0}', space=vmem, size = 0x2000, scoped, tag = 'output window, operand 0']
    #allocation14 [shape = 'u8[8192]{0}', space=vmem, size = 0x2000, scoped, tag = 'output window, operand 1']
    #allocation15 [shape = 's32[2]{0}', space=sflag, size = 0x8, scoped, tag = 'scoped memory for tpu_custom_call.1']
    %15 = vsyncpa [#allocation5], 0
    %s16 = scalar_lea.sflag [#allocation5], 1
    %17 = vsyncpa %s16, 0
    %18 = vsyncpa [#allocation8], 0
    %s19 = scalar_lea.sflag [#allocation8], 1
    %20 = vsyncpa %s19, 0
    %21 = vsyncpa [#allocation11], 0
    %22 = vsyncpa [#allocation6], 0
    %s23 = scalar_lea.sflag [#allocation6], 1
    %24 = vsyncpa %s23, 0
    %25 = vsyncpa [#allocation15], 0
    %s26 = scalar_lea.sflag [#allocation15], 1
    %27 = vsyncpa %s26, 0
    loop: start=0, step=1, limit=4
    $region2: #{tpu_custom_call.1} parent=1 // loop_pre_header
      _
    $region3: #{tpu_custom_call.1} parent=1 // loop_header
      %s29 = sphi 0, %s33
      %p30 = scmp.ge.s32.totalorder %s29, 4
      %s36 = sphi 0, %s48
      %s37 = sphi 0, %s44
      %s38 = sphi 0, %s36
      %s39 = sphi 0, %s37
      %s40 = sphi 0, %s38
      %s41 = sphi 0, %s39
      %s53 = sphi 0, %s55
      %s56 = sphi 0, %s53
      %s57 = sphi 0, %s56
      %s73 = sphi 0, %s57
      %s79 = sphi 0, %s81
      %s82 = sphi 0, %s79
      %s83 = sphi 0, %s82
      %s99 = sphi 0, %s83
      %s103 = sphi 0, %s103
      %s105 = sphi 0, %s103
      %s106 = sphi 0, %s105
      %s120 = sphi 0, %s106
      %s124 = sphi 0, %s124
      %s126 = sphi 0, %s124
      %s127 = sphi 0, %s126
      %s141 = sphi 0, %s127
      %s145 = sphi 0, %s145
      %s147 = sphi 0, %s145
      %s148 = sphi 0, %s147
      %s162 = sphi 0, %s148
      %s166 = sphi 0, %s166
      %s168 = sphi 0, %s166
      %s169 = sphi 0, %s168
      %s183 = sphi 0, %s169
      %s187 = sphi 0, %s187
      %s189 = sphi 0, %s187
      %s190 = sphi 0, %s189
      %s204 = sphi 0, %s190
      %s208 = sphi 0, %s208
      %s210 = sphi 0, %s208
      %s211 = sphi 0, %s210
      %s225 = sphi 0, %s211
      %s233 = sphi 0, %s235
      %s236 = sphi 0, %s233
      %s237 = sphi 0, %s236
      %s253 = sphi 0, %s237
      %s261 = sphi 0, %s263
      %s264 = sphi 0, %s261
      %s265 = sphi 0, %s264
      %s281 = sphi 0, %s265
    $region4: #{tpu_custom_call.1} parent=1 // loop_header_branch
      %32 = sbr.rel (%p30) target = $region8
    $region5: #{tpu_custom_call.1} parent=1 // loop_body
      %s34 = ssub.s32 %s29, 1
      %s35 = ssub.s32 %s29, 2
      %s42 = sadd.s32 1, %s37
      %p43 = scmp.ge.s32.totalorder %s42, 1
      %s44 = scalar_select %p43, 0, %s42
      %s45 = sadd.s32 1, %s36
      %s46 = scalar_select %p43, %s45, %s36
      %p47 = scmp.ge.s32.totalorder %s46, 2
      %s48 = scalar_select %p47, 0, %s46
      %s49 = ssub.s32 %s36, %s48
      %s50 = ssub.s32 %s37, %s44
      %s51 = sor.u32 %s49, %s50
      %p52 = scmp.eq.s32.totalorder %s51, 0
      %s54 = sadd.s32 %s53, 1
      %s55 = scalar_select %p52, %s53, %s54
      %p58 = pneg %p52
      %p59 = scmp.eq.s32.totalorder %s29, 1
      %p60 = por %p58, %p59
      %p61 = scmp.ne.s32.totalorder %s53, %s56
      %p62 = scmp.eq.s32.totalorder %s29, 0
      %p63 = por %p61, %p62
      %p64 = scmp.ne.s32.totalorder %s53, %s56
      %p65 = scmp.eq.s32.totalorder %s34, 1
      %p66 = por %p64, %p65
      %p67 = scmp.ne.s32.totalorder %s56, %s57
      %p68 = scmp.eq.s32.totalorder %s34, 0
      %p69 = por %p67, %p68
      %p70 = scmp.ne.s32.totalorder %s56, %s57
      %p71 = scmp.eq.s32.totalorder %s35, 1
      %p72 = por %p70, %p71
      %p74 = scmp.ne.s32.totalorder %s57, %s73
      %p75 = scmp.eq.s32.totalorder %s35, 0
      %p76 = por %p74, %p75
      %s77 = ssub.s32 %s36, %s48
      %p78 = scmp.eq.s32.totalorder %s77, 0
      %s80 = sadd.s32 %s79, 1
      %s81 = scalar_select %p78, %s79, %s80
      %p84 = pneg %p78
      %p85 = scmp.eq.s32.totalorder %s29, 1
      %p86 = por %p84, %p85
      %p87 = scmp.ne.s32.totalorder %s79, %s82
      %p88 = scmp.eq.s32.totalorder %s29, 0
      %p89 = por %p87, %p88
      %p90 = scmp.ne.s32.totalorder %s79, %s82
      %p91 = scmp.eq.s32.totalorder %s34, 1
      %p92 = por %p90, %p91
      %p93 = scmp.ne.s32.totalorder %s82, %s83
      %p94 = scmp.eq.s32.totalorder %s34, 0
      %p95 = por %p93, %p94
      %p96 = scmp.ne.s32.totalorder %s82, %s83
      %p97 = scmp.eq.s32.totalorder %s35, 1
      %p98 = por %p96, %p97
      %p100 = scmp.ne.s32.totalorder %s83, %s99
      %p101 = scmp.eq.s32.totalorder %s35, 0
      %p102 = por %p100, %p101
      %s104 = sadd.s32 %s103, 1
      %p107 = scmp.eq.s32.totalorder %s29, 1
      %p108 = scmp.ne.s32.totalorder %s103, %s105
      %p109 = scmp.eq.s32.totalorder %s29, 0
      %p110 = por %p108, %p109
      %p111 = scmp.ne.s32.totalorder %s103, %s105
      %p112 = scmp.eq.s32.totalorder %s34, 1
      %p113 = por %p111, %p112
      %p114 = scmp.ne.s32.totalorder %s105, %s106
      %p115 = scmp.eq.s32.totalorder %s34, 0
      %p116 = por %p114, %p115
      %p117 = scmp.ne.s32.totalorder %s105, %s106
      %p118 = scmp.eq.s32.totalorder %s35, 1
      %p119 = por %p117, %p118
      %p121 = scmp.ne.s32.totalorder %s106, %s120
      %p122 = scmp.eq.s32.totalorder %s35, 0
      %p123 = por %p121, %p122
      %s125 = sadd.s32 %s124, 1
      %p128 = scmp.eq.s32.totalorder %s29, 1
      %p129 = scmp.ne.s32.totalorder %s124, %s126
      %p130 = scmp.eq.s32.totalorder %s29, 0
      %p131 = por %p129, %p130
      %p132 = scmp.ne.s32.totalorder %s124, %s126
      %p133 = scmp.eq.s32.totalorder %s34, 1
      %p134 = por %p132, %p133
      %p135 = scmp.ne.s32.totalorder %s126, %s127
      %p136 = scmp.eq.s32.totalorder %s34, 0
      %p137 = por %p135, %p136
      %p138 = scmp.ne.s32.totalorder %s126, %s127
      %p139 = scmp.eq.s32.totalorder %s35, 1
      %p140 = por %p138, %p139
      %p142 = scmp.ne.s32.totalorder %s127, %s141
      %p143 = scmp.eq.s32.totalorder %s35, 0
      %p144 = por %p142, %p143
      %s146 = sadd.s32 %s145, 1
      %p149 = scmp.eq.s32.totalorder %s29, 1
      %p150 = scmp.ne.s32.totalorder %s145, %s147
      %p151 = scmp.eq.s32.totalorder %s29, 0
      %p152 = por %p150, %p151
      %p153 = scmp.ne.s32.totalorder %s145, %s147
      %p154 = scmp.eq.s32.totalorder %s34, 1
      %p155 = por %p153, %p154
      %p156 = scmp.ne.s32.totalorder %s147, %s148
      %p157 = scmp.eq.s32.totalorder %s34, 0
      %p158 = por %p156, %p157
      %p159 = scmp.ne.s32.totalorder %s147, %s148
      %p160 = scmp.eq.s32.totalorder %s35, 1
      %p161 = por %p159, %p160
      %p163 = scmp.ne.s32.totalorder %s148, %s162
      %p164 = scmp.eq.s32.totalorder %s35, 0
      %p165 = por %p163, %p164
      %s167 = sadd.s32 %s166, 1
      %p170 = scmp.eq.s32.totalorder %s29, 1
      %p171 = scmp.ne.s32.totalorder %s166, %s168
      %p172 = scmp.eq.s32.totalorder %s29, 0
      %p173 = por %p171, %p172
      %p174 = scmp.ne.s32.totalorder %s166, %s168
      %p175 = scmp.eq.s32.totalorder %s34, 1
      %p176 = por %p174, %p175
      %p177 = scmp.ne.s32.totalorder %s168, %s169
      %p178 = scmp.eq.s32.totalorder %s34, 0
      %p179 = por %p177, %p178
      %p180 = scmp.ne.s32.totalorder %s168, %s169
      %p181 = scmp.eq.s32.totalorder %s35, 1
      %p182 = por %p180, %p181
      %p184 = scmp.ne.s32.totalorder %s169, %s183
      %p185 = scmp.eq.s32.totalorder %s35, 0
      %p186 = por %p184, %p185
      %s188 = sadd.s32 %s187, 1
      %p191 = scmp.eq.s32.totalorder %s29, 1
      %p192 = scmp.ne.s32.totalorder %s187, %s189
      %p193 = scmp.eq.s32.totalorder %s29, 0
      %p194 = por %p192, %p193
      %p195 = scmp.ne.s32.totalorder %s187, %s189
      %p196 = scmp.eq.s32.totalorder %s34, 1
      %p197 = por %p195, %p196
      %p198 = scmp.ne.s32.totalorder %s189, %s190
      %p199 = scmp.eq.s32.totalorder %s34, 0
      %p200 = por %p198, %p199
      %p201 = scmp.ne.s32.totalorder %s189, %s190
      %p202 = scmp.eq.s32.totalorder %s35, 1
      %p203 = por %p201, %p202
      %p205 = scmp.ne.s32.totalorder %s190, %s204
      %p206 = scmp.eq.s32.totalorder %s35, 0
      %p207 = por %p205, %p206
      %s209 = sadd.s32 %s208, 1
      %p212 = scmp.eq.s32.totalorder %s29, 1
      %p213 = scmp.ne.s32.totalorder %s208, %s210
      %p214 = scmp.eq.s32.totalorder %s29, 0
      %p215 = por %p213, %p214
      %p216 = scmp.ne.s32.totalorder %s208, %s210
      %p217 = scmp.eq.s32.totalorder %s34, 1
      %p218 = por %p216, %p217
      %p219 = scmp.ne.s32.totalorder %s210, %s211
      %p220 = scmp.eq.s32.totalorder %s34, 0
      %p221 = por %p219, %p220
      %p222 = scmp.ne.s32.totalorder %s210, %s211
      %p223 = scmp.eq.s32.totalorder %s35, 1
      %p224 = por %p222, %p223
      %p226 = scmp.ne.s32.totalorder %s211, %s225
      %p227 = scmp.eq.s32.totalorder %s35, 0
      %p228 = por %p226, %p227
      %s229 = ssub.s32 %s36, %s48
      %s230 = ssub.s32 %s37, %s44
      %s231 = sor.u32 %s229, %s230
      %p232 = scmp.eq.s32.totalorder %s231, 0
      %s234 = sadd.s32 %s233, 1
      %s235 = scalar_select %p232, %s233, %s234
      %p238 = pneg %p232
      %p239 = scmp.eq.s32.totalorder %s29, 1
      %p240 = por %p238, %p239
      %p241 = scmp.ne.s32.totalorder %s233, %s236
      %p242 = scmp.eq.s32.totalorder %s29, 0
      %p243 = por %p241, %p242
      %p244 = scmp.ne.s32.totalorder %s233, %s236
      %p245 = scmp.eq.s32.totalorder %s34, 1
      %p246 = por %p244, %p245
      %p247 = scmp.ne.s32.totalorder %s236, %s237
      %p248 = scmp.eq.s32.totalorder %s34, 0
      %p249 = por %p247, %p248
      %p250 = scmp.ne.s32.totalorder %s236, %s237
      %p251 = scmp.eq.s32.totalorder %s35, 1
      %p252 = por %p250, %p251
      %p254 = scmp.ne.s32.totalorder %s237, %s253
      %p255 = scmp.eq.s32.totalorder %s35, 0
      %p256 = por %p254, %p255
      %s257 = ssub.s32 %s36, %s48
      %s258 = ssub.s32 %s37, %s44
      %s259 = sor.u32 %s257, %s258
      %p260 = scmp.eq.s32.totalorder %s259, 0
      %s262 = sadd.s32 %s261, 1
      %s263 = scalar_select %p260, %s261, %s262
      %p266 = pneg %p260
      %p267 = scmp.eq.s32.totalorder %s29, 1
      %p268 = por %p266, %p267
      %p269 = scmp.ne.s32.totalorder %s261, %s264
      %p270 = scmp.eq.s32.totalorder %s29, 0
      %p271 = por %p269, %p270
      %p272 = scmp.ne.s32.totalorder %s261, %s264
      %p273 = scmp.eq.s32.totalorder %s34, 1
      %p274 = por %p272, %p273
      %p275 = scmp.ne.s32.totalorder %s264, %s265
      %p276 = scmp.eq.s32.totalorder %s34, 0
      %p277 = por %p275, %p276
      %p278 = scmp.ne.s32.totalorder %s264, %s265
      %p279 = scmp.eq.s32.totalorder %s35, 1
      %p280 = por %p278, %p279
      %p282 = scmp.ne.s32.totalorder %s265, %s281
      %p283 = scmp.eq.s32.totalorder %s35, 0
      %p284 = por %p282, %p283
      %p285 = scmp.le.s32.totalorder 1, %s29
      %p286 = scmp.lt.s32.totalorder %s29, 3
      %p287 = pnand %p285, %p286
      %p288 = pneg %p287
      // Predicated region
      $region9: #{tpu_custom_call.1} parent=5 // pred_check
        _
      $region10: #{tpu_custom_call.1} parent=5 // pred_check_branch
        %290 = sbr.rel (%p287) target = $region12
      $region11: #{tpu_custom_call.1} parent=5 // pred_region
        %s291 = ssub.s32 %s29, 1
        // Predicated region
        $region13: #{tpu_custom_call.1} parent=11 // pred_check
          %p292 = pneg %p116
        $region14: #{tpu_custom_call.1} parent=11 // pred_check_branch
          %294 = sbr.rel (%p292) target = $region16
        $region15: #{tpu_custom_call.1} parent=11 // pred_region
          %s296 = ssub.s32 2048, 2048
          %297 = vsyncadd [#allocation8], %s296
          %s298 = sshll.u32 [#allocation9], 4
          %s299 = int_to_ptr.vmem [resolvable:$true] %s298
          %304 = dma.hbm_to_vmem [thread:$0]  %s2, 2048, %s299, [#allocation8], 128, 128, 8
        $region16: #{tpu_custom_call.1} parent=11 // pred_fallthru
          _
        // Predicated region
        $region17: #{tpu_custom_call.1} parent=11 // pred_check
          %p305 = pneg %p137
        $region18: #{tpu_custom_call.1} parent=11 // pred_check_branch
          %307 = sbr.rel (%p305) target = $region20
        $region19: #{tpu_custom_call.1} parent=11 // pred_region
          _
        $region20: #{tpu_custom_call.1} parent=11 // pred_fallthru
          _
        // Predicated region
        $region21: #{tpu_custom_call.1} parent=11 // pred_check
          %p308 = pneg %p158
        $region22: #{tpu_custom_call.1} parent=11 // pred_check_branch
          %310 = sbr.rel (%p308) target = $region24
        $region23: #{tpu_custom_call.1} parent=11 // pred_region
          %s312 = ssub.s32 2048, 2048
          %313 = vsyncadd [#allocation11], %s312
          %s314 = sshll.u32 [#allocation10], 4
          %s315 = int_to_ptr.vmem [resolvable:$true] %s314
          %320 = dma.hbm_to_vmem [thread:$0]  %s4, 2048, %s315, [#allocation11], 128, 128, 8
        $region24: #{tpu_custom_call.1} parent=11 // pred_fallthru
          _
        // Predicated region
        $region25: #{tpu_custom_call.1} parent=11 // pred_check
          %p321 = pneg %p179
        $region26: #{tpu_custom_call.1} parent=11 // pred_check_branch
          %323 = sbr.rel (%p321) target = $region28
        $region27: #{tpu_custom_call.1} parent=11 // pred_region
          _
        $region28: #{tpu_custom_call.1} parent=11 // pred_fallthru
          _
        // Predicated region
        $region29: #{tpu_custom_call.1} parent=11 // pred_check
          %p324 = pneg %p200
        $region30: #{tpu_custom_call.1} parent=11 // pred_check_branch
          %326 = sbr.rel (%p324) target = $region32
        $region31: #{tpu_custom_call.1} parent=11 // pred_region
          %s328 = ssub.s32 2048, 2048
          %329 = vsyncadd [#allocation11], %s328
          %s330 = sshll.u32 [#allocation12], 4
          %s331 = int_to_ptr.vmem [resolvable:$true] %s330
          %336 = dma.hbm_to_vmem [thread:$0]  %s6, 2048, %s331, [#allocation11], 128, 128, 8
        $region32: #{tpu_custom_call.1} parent=11 // pred_fallthru
          _
        // Predicated region
        $region33: #{tpu_custom_call.1} parent=11 // pred_check
          %p337 = pneg %p221
        $region34: #{tpu_custom_call.1} parent=11 // pred_check_branch
          %339 = sbr.rel (%p337) target = $region36
        $region35: #{tpu_custom_call.1} parent=11 // pred_region
          _
        $region36: #{tpu_custom_call.1} parent=11 // pred_fallthru
          _
      $region12: #{tpu_custom_call.1} parent=5 // pred_fallthru
        _
      %p340 = scmp.lt.s32.totalorder %s29, 2
      // Predicated region
      $region37: #{tpu_custom_call.1} parent=5 // pred_check
        %p341 = pneg %p340
      $region38: #{tpu_custom_call.1} parent=5 // pred_check_branch
        %343 = sbr.rel (%p341) target = $region40
      $region39: #{tpu_custom_call.1} parent=5 // pred_region
        // Predicated region
        $region41: #{tpu_custom_call.1} parent=39 // pred_check
          %p344 = pneg %p63
        $region42: #{tpu_custom_call.1} parent=39 // pred_check_branch
          %346 = sbr.rel (%p344) target = $region44
        $region43: #{tpu_custom_call.1} parent=39 // pred_region
          %s347 = sand.u32 %s53, 1
          %s348 = scalar_lea.sflag [#allocation5], %s347
          %s349 = sand.u32 %s53, 1
          %s350 = smul.addr %s349, 8
          %s351 = scalar_lea.vmem [#allocation4], %s350
          %s353 = ssub.s32 128, 128
          %354 = vsyncadd %s348, %s353
          %s355 = sadd.s32 %s37, %s36
          %s356 = smul.addr %s355, 128
          %s357 = scalar_lea.hbm %s0, %s356
          %s359 = sshll.u32 %s351, 4
          %s360 = int_to_ptr.vmem [resolvable:$true] %s359
          %362 = dma.hbm_to_vmem [thread:$0]  %s357, 128, %s360, %s348
        $region44: #{tpu_custom_call.1} parent=39 // pred_fallthru
          _
        // Predicated region
        $region45: #{tpu_custom_call.1} parent=39 // pred_check
          %p363 = pneg %p89
        $region46: #{tpu_custom_call.1} parent=39 // pred_check_branch
          %365 = sbr.rel (%p363) target = $region48
        $region47: #{tpu_custom_call.1} parent=39 // pred_region
          %s366 = sand.u32 %s29, 1
          %s367 = scalar_lea.sflag [#allocation8], %s366
          %s368 = sand.u32 %s79, 1
          %s369 = smul.addr %s368, 128
          %s370 = scalar_lea.vmem [#allocation7], %s369
          %s372 = ssub.s32 2048, 2048
          %373 = vsyncadd %s367, %s372
          %s374 = smul.addr %s36, 16
          %s375 = smul.addr %s374, 128
          %s376 = scalar_lea.hbm %s1, %s375
          %s377 = sshll.u32 %s370, 4
          %s378 = int_to_ptr.vmem [resolvable:$true] %s377
          %383 = dma.hbm_to_vmem [thread:$0]  %s376, 2048, %s378, %s367, 128, 128, 8
        $region48: #{tpu_custom_call.1} parent=39 // pred_fallthru
          _
      $region40: #{tpu_custom_call.1} parent=5 // pred_fallthru
        _
      %p384 = scmp.le.s32.totalorder 1, %s29
      %p385 = scmp.lt.s32.totalorder %s29, 3
      %p386 = pnand %p384, %p385
      %p387 = pneg %p386
      // Predicated region
      $region49: #{tpu_custom_call.1} parent=5 // pred_check
        _
      $region50: #{tpu_custom_call.1} parent=5 // pred_check_branch
        %389 = sbr.rel (%p386) target = $region52
      $region51: #{tpu_custom_call.1} parent=5 // pred_region
        %s390 = ssub.s32 %s29, 1
        %s391 = sand.u32 %s56, 1
        %s392 = scalar_lea.sflag [#allocation5], %s391
        %s393 = sand.u32 %s56, 1
        %s394 = smul.addr %s393, 8
        %s395 = scalar_lea.vmem [#allocation4], %s394
        // Predicated region
        $region53: #{tpu_custom_call.1} parent=51 // pred_check
          %p396 = pneg %p69
        $region54: #{tpu_custom_call.1} parent=51 // pred_check_branch
          %398 = sbr.rel (%p396) target = $region56
        $region55: #{tpu_custom_call.1} parent=51 // pred_region
          %399 = dma.done %s392, 128
        $region56: #{tpu_custom_call.1} parent=51 // pred_fallthru
          _
        %s400 = sand.u32 %s34, 1
        %s401 = scalar_lea.sflag [#allocation8], %s400
        %s402 = sand.u32 %s82, 1
        %s403 = smul.addr %s402, 128
        %s404 = scalar_lea.vmem [#allocation7], %s403
        // Predicated region
        $region57: #{tpu_custom_call.1} parent=51 // pred_check
          %p405 = pneg %p95
        $region58: #{tpu_custom_call.1} parent=51 // pred_check_branch
          %407 = sbr.rel (%p405) target = $region60
        $region59: #{tpu_custom_call.1} parent=51 // pred_region
          %408 = dma.done %s401, 2048
        $region60: #{tpu_custom_call.1} parent=51 // pred_fallthru
          _
        // Predicated region
        $region61: #{tpu_custom_call.1} parent=51 // pred_check
          %p409 = pneg %p116
        $region62: #{tpu_custom_call.1} parent=51 // pred_check_branch
          %411 = sbr.rel (%p409) target = $region64
        $region63: #{tpu_custom_call.1} parent=51 // pred_region
          %412 = dma.done [#allocation8], 2048
        $region64: #{tpu_custom_call.1} parent=51 // pred_fallthru
          _
        // Predicated region
        $region65: #{tpu_custom_call.1} parent=51 // pred_check
          %p413 = pneg %p158
        $region66: #{tpu_custom_call.1} parent=51 // pred_check_branch
          %415 = sbr.rel (%p413) target = $region68
        $region67: #{tpu_custom_call.1} parent=51 // pred_region
          %416 = dma.done [#allocation11], 2048
        $region68: #{tpu_custom_call.1} parent=51 // pred_fallthru
          _
        // Predicated region
        $region69: #{tpu_custom_call.1} parent=51 // pred_check
          %p417 = pneg %p200
        $region70: #{tpu_custom_call.1} parent=51 // pred_check_branch
          %419 = sbr.rel (%p417) target = $region72
        $region71: #{tpu_custom_call.1} parent=51 // pred_region
          %420 = dma.done [#allocation11], 2048
        $region72: #{tpu_custom_call.1} parent=51 // pred_fallthru
          _
        %s421 = sand.u32 %s56, 1
        %s422 = scalar_lea.sflag [#allocation5], %s421
        %s423 = sand.u32 %s56, 1
        %s424 = smul.addr %s423, 8
        %s425 = scalar_lea.vmem [#allocation4], %s424
        %p426 = pneg %p69
        %p427 = pneg %p66
        %s428 = sand.u32 %s34, 1
        %s429 = scalar_lea.sflag [#allocation8], %s428
        %s430 = sand.u32 %s82, 1
        %s431 = smul.addr %s430, 128
        %s432 = scalar_lea.vmem [#allocation7], %s431
        %p433 = pneg %p95
        %p434 = pneg %p92
        %p435 = pneg %p116
        %p436 = pneg %p113
        %p437 = pneg %p137
        %p438 = pneg %p134
        %p439 = pneg %p158
        %p440 = pneg %p155
        %p441 = pneg %p179
        %p442 = pneg %p176
        %p443 = pneg %p200
        %p444 = pneg %p197
        %p445 = pneg %p221
        %p446 = pneg %p218
        %p447 = pneg %p249
        %p448 = pneg %p246
        %s449 = sand.u32 %s236, 1
        %s450 = scalar_lea.sflag [#allocation6], %s449
        %s451 = sand.u32 %s236, 1
        %s452 = smul.addr %s451, 8
        %s453 = scalar_lea.vmem [#allocation13], %s452
        %p454 = pneg %p277
        %p455 = pneg %p274
        %s456 = sand.u32 %s264, 1
        %s457 = scalar_lea.sflag [#allocation15], %s456
        %s458 = sand.u32 %s264, 1
        %s459 = smul.addr %s458, 8
        %s460 = scalar_lea.vmem [#allocation14], %s459
        %v461 = vld [vmem:[%s404] sm:$0xff]
        %v462 = vld [vmem:[%s404 + $0x8] sm:$0xff]
        %v463 = vld [vmem:[%s404 + $0x10] sm:$0xff]
        %v464 = vld [vmem:[%s404 + $0x18] sm:$0xff]
        %v465 = vld [vmem:[%s404 + $0x20] sm:$0xff]
        %v466 = vld [vmem:[%s404 + $0x28] sm:$0xff]
        %v467 = vld [vmem:[%s404 + $0x30] sm:$0xff]
        %v468 = vld [vmem:[%s404 + $0x38] sm:$0xff]
        %v469 = vld [vmem:[%s404 + $0x40] sm:$0xff]
        %v470 = vld [vmem:[%s404 + $0x48] sm:$0xff]
        %v471 = vld [vmem:[%s404 + $0x50] sm:$0xff]
        %v472 = vld [vmem:[%s404 + $0x58] sm:$0xff]
        %v473 = vld [vmem:[%s404 + $0x60] sm:$0xff]
        %v474 = vld [vmem:[%s404 + $0x68] sm:$0xff]
        %v475 = vld [vmem:[%s404 + $0x70] sm:$0xff]
        %v476 = vld [vmem:[%s404 + $0x78] sm:$0xff]
        %v477 = vld [vmem:[#allocation10] sm:$0xff]
        %v478 = vld [vmem:[#allocation10 + $0x8] sm:$0xff]
        %v479 = vld [vmem:[#allocation10 + $0x10] sm:$0xff]
        %v480 = vld [vmem:[#allocation10 + $0x18] sm:$0xff]
        %v481 = vld [vmem:[#allocation10 + $0x20] sm:$0xff]
        %v482 = vld [vmem:[#allocation10 + $0x28] sm:$0xff]
        %v483 = vld [vmem:[#allocation10 + $0x30] sm:$0xff]
        %v484 = vld [vmem:[#allocation10 + $0x38] sm:$0xff]
        %v485 = vld [vmem:[#allocation10 + $0x40] sm:$0xff]
        %v486 = vld [vmem:[#allocation10 + $0x48] sm:$0xff]
        %v487 = vld [vmem:[#allocation10 + $0x50] sm:$0xff]
        %v488 = vld [vmem:[#allocation10 + $0x58] sm:$0xff]
        %v489 = vld [vmem:[#allocation10 + $0x60] sm:$0xff]
        %v490 = vld [vmem:[#allocation10 + $0x68] sm:$0xff]
        %v491 = vld [vmem:[#allocation10 + $0x70] sm:$0xff]
        %v492 = vld [vmem:[#allocation10 + $0x78] sm:$0xff]
        %v493 = vld [vmem:[%s5] sm:$0x1]
        %v495 = vlaneseq
        %v496 = vshrl.u32 %v495, 7
        %v497 = vsub.s32 0, %v496
        %v498 = vrot.slane %v493, %v497
        %500 = vmatprep.subr.mxu0 0.0
        %501 = vmatpush1.msra.mxu0 %v477
        %502 = vmatprep.subr.mxu0 0.0
        %503 = vmatpush1.msra.mxu0 %v478
        %504 = vmatprep.subr.mxu0 0.0
        %505 = vmatpush1.msra.mxu0 %v479
        %506 = vmatprep.subr.mxu0 0.0
        %507 = vmatpush1.msra.mxu0 %v480
        %508 = vmatprep.subr.mxu0 0.0
        %509 = vmatpush1.msra.mxu0 %v481
        %510 = vmatprep.subr.mxu0 0.0
        %511 = vmatpush1.msra.mxu0 %v482
        %512 = vmatprep.subr.mxu0 0.0
        %513 = vmatpush1.msra.mxu0 %v483
        %514 = vmatprep.subr.mxu0 0.0
        %515 = vmatpush1.msra.mxu0 %v484
        %516 = vmatprep.subr.mxu0 0.0
        %517 = vmatpush1.msra.mxu0 %v485
        %518 = vmatprep.subr.mxu0 0.0
        %519 = vmatpush1.msra.mxu0 %v486
        %520 = vmatprep.subr.mxu0 0.0
        %521 = vmatpush1.msra.mxu0 %v487
        %522 = vmatprep.subr.mxu0 0.0
        %523 = vmatpush1.msra.mxu0 %v488
        %524 = vmatprep.subr.mxu0 0.0
        %525 = vmatpush1.msra.mxu0 %v489
        %526 = vmatprep.subr.mxu0 0.0
        %527 = vmatpush1.msra.mxu0 %v490
        %528 = vmatprep.subr.mxu0 0.0
        %529 = vmatpush1.msra.mxu0 %v491
        %530 = vmatprep.subr.mxu0 0.0
        %531 = vmatpush1.msra.mxu0 %v492
        %532 = vmatprep.subr.mxu0 0.0
        %533 = vmatpush1.msra.mxu0 0.0
        %534 = vmatprep.subr.mxu0 0.0
        %535 = vmatpush1.msra.mxu0 0.0
        %536 = vmatprep.subr.mxu0 0.0
        %537 = vmatpush1.msra.mxu0 0.0
        %538 = vmatprep.subr.mxu0 0.0
        %539 = vmatpush1.msra.mxu0 0.0
        %540 = vmatprep.subr.mxu0 0.0
        %541 = vmatpush1.msra.mxu0 0.0
        %542 = vmatprep.subr.mxu0 0.0
        %543 = vmatpush1.msra.mxu0 0.0
        %544 = vmatprep.subr.mxu0 0.0
        %545 = vmatpush1.msra.mxu0 0.0
        %546 = vmatprep.subr.mxu0 0.0
        %547 = vmatpush1.msra.mxu0 0.0
        %548 = vmatprep.subr.mxu0 0.0
        %549 = vmatpush1.msra.mxu0 0.0
        %550 = vmatprep.subr.mxu0 0.0
        %551 = vmatpush1.msra.mxu0 0.0
        %552 = vmatprep.subr.mxu0 0.0
        %553 = vmatpush1.msra.mxu0 0.0
        %554 = vmatprep.subr.mxu0 0.0
        %555 = vmatpush1.msra.mxu0 0.0
        %556 = vmatprep.subr.mxu0 0.0
        %557 = vmatpush1.msra.mxu0 0.0
        %558 = vmatprep.subr.mxu0 0.0
        %559 = vmatpush1.msra.mxu0 0.0
        %560 = vmatprep.subr.mxu0 0.0
        %561 = vmatpush1.msra.mxu0 0.0
        %562 = vmatprep.subr.mxu0 0.0
        %563 = vmatpush1.msra.mxu0 0.0
        %564 = vmatprep.mubr.f32.mxu0 0.0
        %565 = vmatmul.mubr.f32.gmra.mrb[0].mxu0 %v461
        %v566 = vpop.f32.mrb[0].mxu0
        %v567 = vadd.f32 %v498, %v566
        %v568 = vpop.f32.mrb[0].mxu0
        %569 = vmatprep.mubr.f32.mxu0 0.0
        %570 = vmatmul.mubr.f32.gmra.mrb[0].mxu0 %v462
        %v571 = vpop.f32.mrb[0].mxu0
        %v572 = vadd.f32 %v498, %v571
        %v573 = vpop.f32.mrb[0].mxu0
        %574 = vmatprep.mubr.f32.mxu0 0.0
        %575 = vmatmul.mubr.f32.gmra.mrb[0].mxu0 %v463
        %v576 = vpop.f32.mrb[0].mxu0
        %v577 = vadd.f32 %v498, %v576
        %v578 = vpop.f32.mrb[0].mxu0
        %579 = vmatprep.mubr.f32.mxu0 0.0
        %580 = vmatmul.mubr.f32.gmra.mrb[0].mxu0 %v464
        %v581 = vpop.f32.mrb[0].mxu0
        %v582 = vadd.f32 %v498, %v581
        %v583 = vpop.f32.mrb[0].mxu0
        %584 = vmatprep.mubr.f32.mxu0 0.0
        %585 = vmatmul.mubr.f32.gmra.mrb[0].mxu0 %v465
        %v586 = vpop.f32.mrb[0].mxu0
        %v587 = vadd.f32 %v498, %v586
        %v588 = vpop.f32.mrb[0].mxu0
        %589 = vmatprep.mubr.f32.mxu0 0.0
        %590 = vmatmul.mubr.f32.gmra.mrb[0].mxu0 %v466
        %v591 = vpop.f32.mrb[0].mxu0
        %v592 = vadd.f32 %v498, %v591
        %v593 = vpop.f32.mrb[0].mxu0
        %594 = vmatprep.mubr.f32.mxu0 0.0
        %595 = vmatmul.mubr.f32.gmra.mrb[0].mxu0 %v467
        %v596 = vpop.f32.mrb[0].mxu0
        %v597 = vadd.f32 %v498, %v596
        %v598 = vpop.f32.mrb[0].mxu0
        %599 = vmatprep.mubr.f32.mxu0 0.0
        %600 = vmatmul.mubr.f32.gmra.mrb[0].mxu0 %v468
        %v601 = vpop.f32.mrb[0].mxu0
        %v602 = vadd.f32 %v498, %v601
        %v603 = vpop.f32.mrb[0].mxu0
        %604 = vmatprep.mubr.f32.mxu0 0.0
        %605 = vmatmul.mubr.f32.gmra.mrb[0].mxu0 %v469
        %v606 = vpop.f32.mrb[0].mxu0
        %v607 = vadd.f32 %v498, %v606
        %v608 = vpop.f32.mrb[0].mxu0
        %609 = vmatprep.mubr.f32.mxu0 0.0
        %610 = vmatmul.mubr.f32.gmra.mrb[0].mxu0 %v470
        %v611 = vpop.f32.mrb[0].mxu0
        %v612 = vadd.f32 %v498, %v611
        %v613 = vpop.f32.mrb[0].mxu0
        %614 = vmatprep.mubr.f32.mxu0 0.0
        %615 = vmatmul.mubr.f32.gmra.mrb[0].mxu0 %v471
        %v616 = vpop.f32.mrb[0].mxu0
        %v617 = vadd.f32 %v498, %v616
        %v618 = vpop.f32.mrb[0].mxu0
        %619 = vmatprep.mubr.f32.mxu0 0.0
        %620 = vmatmul.mubr.f32.gmra.mrb[0].mxu0 %v472
        %v621 = vpop.f32.mrb[0].mxu0
        %v622 = vadd.f32 %v498, %v621
        %v623 = vpop.f32.mrb[0].mxu0
        %624 = vmatprep.mubr.f32.mxu0 0.0
        %625 = vmatmul.mubr.f32.gmra.mrb[0].mxu0 %v473
        %v626 = vpop.f32.mrb[0].mxu0
        %v627 = vadd.f32 %v498, %v626
        %v628 = vpop.f32.mrb[0].mxu0
        %629 = vmatprep.mubr.f32.mxu0 0.0
        %630 = vmatmul.mubr.f32.gmra.mrb[0].mxu0 %v474
        %v631 = vpop.f32.mrb[0].mxu0
        %v632 = vadd.f32 %v498, %v631
        %v633 = vpop.f32.mrb[0].mxu0
        %634 = vmatprep.mubr.f32.mxu0 0.0
        %635 = vmatmul.mubr.f32.gmra.mrb[0].mxu0 %v475
        %v636 = vpop.f32.mrb[0].mxu0
        %v637 = vadd.f32 %v498, %v636
        %v638 = vpop.f32.mrb[0].mxu0
        %639 = vmatprep.mubr.f32.mxu0 0.0
        %640 = vmatmul.mubr.f32.gmra.mrb[0].mxu0 %v476
        %v641 = vpop.f32.mrb[0].mxu0
        %v642 = vadd.f32 %v498, %v641
        %v643 = vpop.f32.mrb[0].mxu0
        %644 = vdwg.mxu0
        %v645 = vld [vmem:[#allocation12] sm:$0xff]
        %v646 = vld [vmem:[#allocation12 + $0x8] sm:$0xff]
        %v647 = vld [vmem:[#allocation12 + $0x10] sm:$0xff]
        %v648 = vld [vmem:[#allocation12 + $0x18] sm:$0xff]
        %v649 = vld [vmem:[#allocation12 + $0x20] sm:$0xff]
        %v650 = vld [vmem:[#allocation12 + $0x28] sm:$0xff]
        %v651 = vld [vmem:[#allocation12 + $0x30] sm:$0xff]
        %v652 = vld [vmem:[#allocation12 + $0x38] sm:$0xff]
        %v653 = vld [vmem:[#allocation12 + $0x40] sm:$0xff]
        %v654 = vld [vmem:[#allocation12 + $0x48] sm:$0xff]
        %v655 = vld [vmem:[#allocation12 + $0x50] sm:$0xff]
        %v656 = vld [vmem:[#allocation12 + $0x58] sm:$0xff]
        %v657 = vld [vmem:[#allocation12 + $0x60] sm:$0xff]
        %v658 = vld [vmem:[#allocation12 + $0x68] sm:$0xff]
        %v659 = vld [vmem:[#allocation12 + $0x70] sm:$0xff]
        %v660 = vld [vmem:[#allocation12 + $0x78] sm:$0xff]
        %v661 = vld [vmem:[%s7] sm:$0x1]
        %v663 = vlaneseq
        %v664 = vshrl.u32 %v663, 7
        %v665 = vsub.s32 0, %v664
        %v666 = vrot.slane %v661, %v665
        %668 = vmatprep.subr.mxu0 0.0
        %669 = vmatpush1.msra.mxu0 %v645
        %670 = vmatprep.subr.mxu0 0.0
        %671 = vmatpush1.msra.mxu0 %v646
        %672 = vmatprep.subr.mxu0 0.0
        %673 = vmatpush1.msra.mxu0 %v647
        %674 = vmatprep.subr.mxu0 0.0
        %675 = vmatpush1.msra.mxu0 %v648
        %676 = vmatprep.subr.mxu0 0.0
        %677 = vmatpush1.msra.mxu0 %v649
        %678 = vmatprep.subr.mxu0 0.0
        %679 = vmatpush1.msra.mxu0 %v650
        %680 = vmatprep.subr.mxu0 0.0
        %681 = vmatpush1.msra.mxu0 %v651
        %682 = vmatprep.subr.mxu0 0.0
        %683 = vmatpush1.msra.mxu0 %v652
        %684 = vmatprep.subr.mxu0 0.0
        %685 = vmatpush1.msra.mxu0 %v653
        %686 = vmatprep.subr.mxu0 0.0
        %687 = vmatpush1.msra.mxu0 %v654
        %688 = vmatprep.subr.mxu0 0.0
        %689 = vmatpush1.msra.mxu0 %v655
        %690 = vmatprep.subr.mxu0 0.0
        %691 = vmatpush1.msra.mxu0 %v656
        %692 = vmatprep.subr.mxu0 0.0
        %693 = vmatpush1.msra.mxu0 %v657
        %694 = vmatprep.subr.mxu0 0.0
        %695 = vmatpush1.msra.mxu0 %v658
        %696 = vmatprep.subr.mxu0 0.0
        %697 = vmatpush1.msra.mxu0 %v659
        %698 = vmatprep.subr.mxu0 0.0
        %699 = vmatpush1.msra.mxu0 %v660
        %700 = vmatprep.subr.mxu0 0.0
        %701 = vmatpush1.msra.mxu0 0.0
        %702 = vmatprep.subr.mxu0 0.0
        %703 = vmatpush1.msra.mxu0 0.0
        %704 = vmatprep.subr.mxu0 0.0
        %705 = vmatpush1.msra.mxu0 0.0
        %706 = vmatprep.subr.mxu0 0.0
        %707 = vmatpush1.msra.mxu0 0.0
        %708 = vmatprep.subr.mxu0 0.0
        %709 = vmatpush1.msra.mxu0 0.0
        %710 = vmatprep.subr.mxu0 0.0
        %711 = vmatpush1.msra.mxu0 0.0
        %712 = vmatprep.subr.mxu0 0.0
        %713 = vmatpush1.msra.mxu0 0.0
        %714 = vmatprep.subr.mxu0 0.0
        %715 = vmatpush1.msra.mxu0 0.0
        %716 = vmatprep.subr.mxu0 0.0
        %717 = vmatpush1.msra.mxu0 0.0
        %718 = vmatprep.subr.mxu0 0.0
        %719 = vmatpush1.msra.mxu0 0.0
        %720 = vmatprep.subr.mxu0 0.0
        %721 = vmatpush1.msra.mxu0 0.0
        %722 = vmatprep.subr.mxu0 0.0
        %723 = vmatpush1.msra.mxu0 0.0
        %724 = vmatprep.subr.mxu0 0.0
        %725 = vmatpush1.msra.mxu0 0.0
        %726 = vmatprep.subr.mxu0 0.0
        %727 = vmatpush1.msra.mxu0 0.0
        %728 = vmatprep.subr.mxu0 0.0
        %729 = vmatpush1.msra.mxu0 0.0
        %730 = vmatprep.subr.mxu0 0.0
        %731 = vmatpush1.msra.mxu0 0.0
        %732 = vmatprep.mubr.f32.mxu0 0.0
        %733 = vmatmul.mubr.f32.gmra.mrb[0].mxu0 %v567
        %v734 = vpop.f32.mrb[0].mxu0
        %v735 = vadd.f32 %v666, %v734
        %v736 = vpop.f32.mrb[0].mxu0
        %737 = vmatprep.mubr.f32.mxu0 0.0
        %738 = vmatmul.mubr.f32.gmra.mrb[0].mxu0 %v572
        %v739 = vpop.f32.mrb[0].mxu0
        %v740 = vadd.f32 %v666, %v739
        %v741 = vpop.f32.mrb[0].mxu0
        %742 = vmatprep.mubr.f32.mxu0 0.0
        %743 = vmatmul.mubr.f32.gmra.mrb[0].mxu0 %v577
        %v744 = vpop.f32.mrb[0].mxu0
        %v745 = vadd.f32 %v666, %v744
        %v746 = vpop.f32.mrb[0].mxu0
        %747 = vmatprep.mubr.f32.mxu0 0.0
        %748 = vmatmul.mubr.f32.gmra.mrb[0].mxu0 %v582
        %v749 = vpop.f32.mrb[0].mxu0
        %v750 = vadd.f32 %v666, %v749
        %v751 = vpop.f32.mrb[0].mxu0
        %752 = vmatprep.mubr.f32.mxu0 0.0
        %753 = vmatmul.mubr.f32.gmra.mrb[0].mxu0 %v587
        %v754 = vpop.f32.mrb[0].mxu0
        %v755 = vadd.f32 %v666, %v754
        %v756 = vpop.f32.mrb[0].mxu0
        %757 = vmatprep.mubr.f32.mxu0 0.0
        %758 = vmatmul.mubr.f32.gmra.mrb[0].mxu0 %v592
        %v759 = vpop.f32.mrb[0].mxu0
        %v760 = vadd.f32 %v666, %v759
        %v761 = vpop.f32.mrb[0].mxu0
        %762 = vmatprep.mubr.f32.mxu0 0.0
        %763 = vmatmul.mubr.f32.gmra.mrb[0].mxu0 %v597
        %v764 = vpop.f32.mrb[0].mxu0
        %v765 = vadd.f32 %v666, %v764
        %v766 = vpop.f32.mrb[0].mxu0
        %767 = vmatprep.mubr.f32.mxu0 0.0
        %768 = vmatmul.mubr.f32.gmra.mrb[0].mxu0 %v602
        %v769 = vpop.f32.mrb[0].mxu0
        %v770 = vadd.f32 %v666, %v769
        %v771 = vpop.f32.mrb[0].mxu0
        %772 = vmatprep.mubr.f32.mxu0 0.0
        %773 = vmatmul.mubr.f32.gmra.mrb[0].mxu0 %v607
        %v774 = vpop.f32.mrb[0].mxu0
        %v775 = vadd.f32 %v666, %v774
        %v776 = vpop.f32.mrb[0].mxu0
        %777 = vmatprep.mubr.f32.mxu0 0.0
        %778 = vmatmul.mubr.f32.gmra.mrb[0].mxu0 %v612
        %v779 = vpop.f32.mrb[0].mxu0
        %v780 = vadd.f32 %v666, %v779
        %v781 = vpop.f32.mrb[0].mxu0
        %782 = vmatprep.mubr.f32.mxu0 0.0
        %783 = vmatmul.mubr.f32.gmra.mrb[0].mxu0 %v617
        %v784 = vpop.f32.mrb[0].mxu0
        %v785 = vadd.f32 %v666, %v784
        %v786 = vpop.f32.mrb[0].mxu0
        %787 = vmatprep.mubr.f32.mxu0 0.0
        %788 = vmatmul.mubr.f32.gmra.mrb[0].mxu0 %v622
        %v789 = vpop.f32.mrb[0].mxu0
        %v790 = vadd.f32 %v666, %v789
        %v791 = vpop.f32.mrb[0].mxu0
        %792 = vmatprep.mubr.f32.mxu0 0.0
        %793 = vmatmul.mubr.f32.gmra.mrb[0].mxu0 %v627
        %v794 = vpop.f32.mrb[0].mxu0
        %v795 = vadd.f32 %v666, %v794
        %v796 = vpop.f32.mrb[0].mxu0
        %797 = vmatprep.mubr.f32.mxu0 0.0
        %798 = vmatmul.mubr.f32.gmra.mrb[0].mxu0 %v632
        %v799 = vpop.f32.mrb[0].mxu0
        %v800 = vadd.f32 %v666, %v799
        %v801 = vpop.f32.mrb[0].mxu0
        %802 = vmatprep.mubr.f32.mxu0 0.0
        %803 = vmatmul.mubr.f32.gmra.mrb[0].mxu0 %v637
        %v804 = vpop.f32.mrb[0].mxu0
        %v805 = vadd.f32 %v666, %v804
        %v806 = vpop.f32.mrb[0].mxu0
        %807 = vmatprep.mubr.f32.mxu0 0.0
        %808 = vmatmul.mubr.f32.gmra.mrb[0].mxu0 %v642
        %v809 = vpop.f32.mrb[0].mxu0
        %v810 = vadd.f32 %v666, %v809
        %v811 = vpop.f32.mrb[0].mxu0
        %812 = vdwg.mxu0
        %813 = vxpose.xlu0.b32.start [1/16] %v567, 128
        %814 = vxpose.xlu0.b32.cont [2/16] %v572, 128
        %815 = vxpose.xlu0.b32.cont [3/16] %v577, 128
        %816 = vxpose.xlu0.b32.cont [4/16] %v582, 128
        %817 = vxpose.xlu0.b32.cont [5/16] %v587, 128
        %818 = vxpose.xlu0.b32.cont [6/16] %v592, 128
        %819 = vxpose.xlu0.b32.cont [7/16] %v597, 128
        %820 = vxpose.xlu0.b32.cont [8/16] %v602, 128
        %821 = vxpose.xlu0.b32.cont [9/16] %v607, 128
        %822 = vxpose.xlu0.b32.cont [10/16] %v612, 128
        %823 = vxpose.xlu0.b32.cont [11/16] %v617, 128
        %824 = vxpose.xlu0.b32.cont [12/16] %v622, 128
        %825 = vxpose.xlu0.b32.cont [13/16] %v627, 128
        %826 = vxpose.xlu0.b32.cont [14/16] %v632, 128
        %827 = vxpose.xlu0.b32.cont [15/16] %v637, 128
        %828 = vxpose.xlu0.b32.end [16/16] %v642, 128
        %v829 = vpop.trf.xlu0
        %v830 = vpop.trf.xlu0
        %v831 = vpop.trf.xlu0
        %v832 = vpop.trf.xlu0
        %v833 = vpop.trf.xlu0
        %v834 = vpop.trf.xlu0
        %v835 = vpop.trf.xlu0
        %v836 = vpop.trf.xlu0
        %v837 = vpop.trf.xlu0
        %v838 = vpop.trf.xlu0
        %v839 = vpop.trf.xlu0
        %v840 = vpop.trf.xlu0
        %v841 = vpop.trf.xlu0
        %v842 = vpop.trf.xlu0
        %v843 = vpop.trf.xlu0
        %v844 = vpop.trf.xlu0
        %845 = vst [vmem:[#allocation2] sm:$0xff] %v829
        %846 = vst [vmem:[#allocation2 + $0x8] sm:$0xff] %v830
        %847 = vst [vmem:[#allocation2 + $0x10] sm:$0xff] %v831
        %848 = vst [vmem:[#allocation2 + $0x18] sm:$0xff] %v832
        %849 = vst [vmem:[#allocation2 + $0x20] sm:$0xff] %v833
        %850 = vst [vmem:[#allocation2 + $0x28] sm:$0xff] %v834
        %851 = vst [vmem:[#allocation2 + $0x30] sm:$0xff] %v835
        %852 = vst [vmem:[#allocation2 + $0x38] sm:$0xff] %v836
        %853 = vst [vmem:[#allocation2 + $0x40] sm:$0xff] %v837
        %854 = vst [vmem:[#allocation2 + $0x48] sm:$0xff] %v838
        %855 = vst [vmem:[#allocation2 + $0x50] sm:$0xff] %v839
        %856 = vst [vmem:[#allocation2 + $0x58] sm:$0xff] %v840
        %857 = vst [vmem:[#allocation2 + $0x60] sm:$0xff] %v841
        %858 = vst [vmem:[#allocation2 + $0x68] sm:$0xff] %v842
        %859 = vst [vmem:[#allocation2 + $0x70] sm:$0xff] %v843
        %860 = vst [vmem:[#allocation2 + $0x78] sm:$0xff] %v844
        %861 = vst [vmem:[#allocation3] sm:$0xff] %v735
        %862 = vst [vmem:[#allocation3 + $0x8] sm:$0xff] %v740
        %863 = vst [vmem:[#allocation3 + $0x10] sm:$0xff] %v745
        %864 = vst [vmem:[#allocation3 + $0x18] sm:$0xff] %v750
        %865 = vst [vmem:[#allocation3 + $0x20] sm:$0xff] %v755
        %866 = vst [vmem:[#allocation3 + $0x28] sm:$0xff] %v760
        %867 = vst [vmem:[#allocation3 + $0x30] sm:$0xff] %v765
        %868 = vst [vmem:[#allocation3 + $0x38] sm:$0xff] %v770
        %869 = vst [vmem:[#allocation3 + $0x40] sm:$0xff] %v775
        %870 = vst [vmem:[#allocation3 + $0x48] sm:$0xff] %v780
        %871 = vst [vmem:[#allocation3 + $0x50] sm:$0xff] %v785
        %872 = vst [vmem:[#allocation3 + $0x58] sm:$0xff] %v790
        %873 = vst [vmem:[#allocation3 + $0x60] sm:$0xff] %v795
        %874 = vst [vmem:[#allocation3 + $0x68] sm:$0xff] %v800
        %875 = vst [vmem:[#allocation3 + $0x70] sm:$0xff] %v805
        %876 = vst [vmem:[#allocation3 + $0x78] sm:$0xff] %v810
        %v877 = vld [vmem:[%s395] sm:$0xff]
        %v878 = vld [vmem:[#allocation9] sm:$0xff]
        %v879 = vld [vmem:[#allocation9 + $0x8] sm:$0xff]
        %v880 = vld [vmem:[#allocation9 + $0x10] sm:$0xff]
        %v881 = vld [vmem:[#allocation9 + $0x18] sm:$0xff]
        %v882 = vld [vmem:[#allocation9 + $0x20] sm:$0xff]
        %v883 = vld [vmem:[#allocation9 + $0x28] sm:$0xff]
        %v884 = vld [vmem:[#allocation9 + $0x30] sm:$0xff]
        %v885 = vld [vmem:[#allocation9 + $0x38] sm:$0xff]
        %v886 = vld [vmem:[#allocation9 + $0x40] sm:$0xff]
        %v887 = vld [vmem:[#allocation9 + $0x48] sm:$0xff]
        %v888 = vld [vmem:[#allocation9 + $0x50] sm:$0xff]
        %v889 = vld [vmem:[#allocation9 + $0x58] sm:$0xff]
        %v890 = vld [vmem:[#allocation9 + $0x60] sm:$0xff]
        %v891 = vld [vmem:[#allocation9 + $0x68] sm:$0xff]
        %v892 = vld [vmem:[#allocation9 + $0x70] sm:$0xff]
        %v893 = vld [vmem:[#allocation9 + $0x78] sm:$0xff]
        %v894 = vld [vmem:[%s3] sm:$0x1]
        %v896 = vlaneseq
        %v897 = vshrl.u32 %v896, 7
        %v898 = vsub.s32 0, %v897
        %v899 = vrot.slane %v894, %v898
        %901 = vmatprep.subr.mxu0 0.0
        %902 = vmatpush1.msra.mxu0 %v878
        %903 = vmatprep.subr.mxu0 0.0
        %904 = vmatpush1.msra.mxu0 %v879
        %905 = vmatprep.subr.mxu0 0.0
        %906 = vmatpush1.msra.mxu0 %v880
        %907 = vmatprep.subr.mxu0 0.0
        %908 = vmatpush1.msra.mxu0 %v881
        %909 = vmatprep.subr.mxu0 0.0
        %910 = vmatpush1.msra.mxu0 %v882
        %911 = vmatprep.subr.mxu0 0.0
        %912 = vmatpush1.msra.mxu0 %v883
        %913 = vmatprep.subr.mxu0 0.0
        %914 = vmatpush1.msra.mxu0 %v884
        %915 = vmatprep.subr.mxu0 0.0
        %916 = vmatpush1.msra.mxu0 %v885
        %917 = vmatprep.subr.mxu0 0.0
        %918 = vmatpush1.msra.mxu0 %v886
        %919 = vmatprep.subr.mxu0 0.0
        %920 = vmatpush1.msra.mxu0 %v887
        %921 = vmatprep.subr.mxu0 0.0
        %922 = vmatpush1.msra.mxu0 %v888
        %923 = vmatprep.subr.mxu0 0.0
        %924 = vmatpush1.msra.mxu0 %v889
        %925 = vmatprep.subr.mxu0 0.0
        %926 = vmatpush1.msra.mxu0 %v890
        %927 = vmatprep.subr.mxu0 0.0
        %928 = vmatpush1.msra.mxu0 %v891
        %929 = vmatprep.subr.mxu0 0.0
        %930 = vmatpush1.msra.mxu0 %v892
        %931 = vmatprep.subr.mxu0 0.0
        %932 = vmatpush1.msra.mxu0 %v893
        %933 = vmatprep.subr.mxu0 0.0
        %934 = vmatpush1.msra.mxu0 0.0
        %935 = vmatprep.subr.mxu0 0.0
        %936 = vmatpush1.msra.mxu0 0.0
        %937 = vmatprep.subr.mxu0 0.0
        %938 = vmatpush1.msra.mxu0 0.0
        %939 = vmatprep.subr.mxu0 0.0
        %940 = vmatpush1.msra.mxu0 0.0
        %941 = vmatprep.subr.mxu0 0.0
        %942 = vmatpush1.msra.mxu0 0.0
        %943 = vmatprep.subr.mxu0 0.0
        %944 = vmatpush1.msra.mxu0 0.0
        %945 = vmatprep.subr.mxu0 0.0
        %946 = vmatpush1.msra.mxu0 0.0
        %947 = vmatprep.subr.mxu0 0.0
        %948 = vmatpush1.msra.mxu0 0.0
        %949 = vmatprep.subr.mxu0 0.0
        %950 = vmatpush1.msra.mxu0 0.0
        %951 = vmatprep.subr.mxu0 0.0
        %952 = vmatpush1.msra.mxu0 0.0
        %953 = vmatprep.subr.mxu0 0.0
        %954 = vmatpush1.msra.mxu0 0.0
        %955 = vmatprep.subr.mxu0 0.0
        %956 = vmatpush1.msra.mxu0 0.0
        %957 = vmatprep.subr.mxu0 0.0
        %958 = vmatpush1.msra.mxu0 0.0
        %959 = vmatprep.subr.mxu0 0.0
        %960 = vmatpush1.msra.mxu0 0.0
        %961 = vmatprep.subr.mxu0 0.0
        %962 = vmatpush1.msra.mxu0 0.0
        %963 = vmatprep.subr.mxu0 0.0
        %964 = vmatpush1.msra.mxu0 0.0
        %965 = vmatprep.mubr.f32.mxu0 0.0
        %966 = vmatmul.mubr.f32.gmra.mrb[0].mxu0 %v877
        %v967 = vpop.f32.mrb[0].mxu0
        %v968 = vadd.f32 %v899, %v967
        %v969 = vpop.f32.mrb[0].mxu0
        %970 = vdwg.mxu0
        %v971 = vld [vmem:[#allocation2] sm:$0xff]
        %v972 = vld [vmem:[#allocation2 + $0x8] sm:$0xff]
        %v973 = vld [vmem:[#allocation2 + $0x10] sm:$0xff]
        %v974 = vld [vmem:[#allocation2 + $0x18] sm:$0xff]
        %v975 = vld [vmem:[#allocation2 + $0x20] sm:$0xff]
        %v976 = vld [vmem:[#allocation2 + $0x28] sm:$0xff]
        %v977 = vld [vmem:[#allocation2 + $0x30] sm:$0xff]
        %v978 = vld [vmem:[#allocation2 + $0x38] sm:$0xff]
        %v979 = vld [vmem:[#allocation2 + $0x40] sm:$0xff]
        %v980 = vld [vmem:[#allocation2 + $0x48] sm:$0xff]
        %v981 = vld [vmem:[#allocation2 + $0x50] sm:$0xff]
        %v982 = vld [vmem:[#allocation2 + $0x58] sm:$0xff]
        %v983 = vld [vmem:[#allocation2 + $0x60] sm:$0xff]
        %v984 = vld [vmem:[#allocation2 + $0x68] sm:$0xff]
        %v985 = vld [vmem:[#allocation2 + $0x70] sm:$0xff]
        %v986 = vld [vmem:[#allocation2 + $0x78] sm:$0xff]
        %987 = vmatprep.subr.mxu0 0.0
        %988 = vmatpush1.msra.mxu0 %v971
        %989 = vmatprep.subr.mxu0 0.0
        %990 = vmatpush1.msra.mxu0 %v972
        %991 = vmatprep.subr.mxu0 0.0
        %992 = vmatpush1.msra.mxu0 %v973
        %993 = vmatprep.subr.mxu0 0.0
        %994 = vmatpush1.msra.mxu0 %v974
        %995 = vmatprep.subr.mxu0 0.0
        %996 = vmatpush1.msra.mxu0 %v975
        %997 = vmatprep.subr.mxu0 0.0
        %998 = vmatpush1.msra.mxu0 %v976
        %999 = vmatprep.subr.mxu0 0.0
        %1000 = vmatpush1.msra.mxu0 %v977
        %1001 = vmatprep.subr.mxu0 0.0
        %1002 = vmatpush1.msra.mxu0 %v978
        %1003 = vmatprep.subr.mxu0 0.0
        %1004 = vmatpush1.msra.mxu0 %v979
        %1005 = vmatprep.subr.mxu0 0.0
        %1006 = vmatpush1.msra.mxu0 %v980
        %1007 = vmatprep.subr.mxu0 0.0
        %1008 = vmatpush1.msra.mxu0 %v981
        %1009 = vmatprep.subr.mxu0 0.0
        %1010 = vmatpush1.msra.mxu0 %v982
        %1011 = vmatprep.subr.mxu0 0.0
        %1012 = vmatpush1.msra.mxu0 %v983
        %1013 = vmatprep.subr.mxu0 0.0
        %1014 = vmatpush1.msra.mxu0 %v984
        %1015 = vmatprep.subr.mxu0 0.0
        %1016 = vmatpush1.msra.mxu0 %v985
        %1017 = vmatprep.subr.mxu0 0.0
        %1018 = vmatpush1.msra.mxu0 %v986
        %1019 = vmatprep.subr.mxu0 0.0
        %1020 = vmatpush1.msra.mxu0 0.0
        %1021 = vmatprep.subr.mxu0 0.0
        %1022 = vmatpush1.msra.mxu0 0.0
        %1023 = vmatprep.subr.mxu0 0.0
        %1024 = vmatpush1.msra.mxu0 0.0
        %1025 = vmatprep.subr.mxu0 0.0
        %1026 = vmatpush1.msra.mxu0 0.0
        %1027 = vmatprep.subr.mxu0 0.0
        %1028 = vmatpush1.msra.mxu0 0.0
        %1029 = vmatprep.subr.mxu0 0.0
        %1030 = vmatpush1.msra.mxu0 0.0
        %1031 = vmatprep.subr.mxu0 0.0
        %1032 = vmatpush1.msra.mxu0 0.0
        %1033 = vmatprep.subr.mxu0 0.0
        %1034 = vmatpush1.msra.mxu0 0.0
        %1035 = vmatprep.subr.mxu0 0.0
        %1036 = vmatpush1.msra.mxu0 0.0
        %1037 = vmatprep.subr.mxu0 0.0
        %1038 = vmatpush1.msra.mxu0 0.0
        %1039 = vmatprep.subr.mxu0 0.0
        %1040 = vmatpush1.msra.mxu0 0.0
        %1041 = vmatprep.subr.mxu0 0.0
        %1042 = vmatpush1.msra.mxu0 0.0
        %1043 = vmatprep.subr.mxu0 0.0
        %1044 = vmatpush1.msra.mxu0 0.0
        %1045 = vmatprep.subr.mxu0 0.0
        %1046 = vmatpush1.msra.mxu0 0.0
        %1047 = vmatprep.subr.mxu0 0.0
        %1048 = vmatpush1.msra.mxu0 0.0
        %1049 = vmatprep.subr.mxu0 0.0
        %1050 = vmatpush1.msra.mxu0 0.0
        %1051 = vmatprep.mubr.f32.mxu0 0.0
        %1052 = vmatmul.mubr.f32.gmra.mrb[0].mxu0 %v968
        %v1053 = vpop.f32.mrb[0].mxu0
        %v1054 = vadd.f32 0.0, %v1053
        %v1055 = vpop.f32.mrb[0].mxu0
        %1056 = vdwg.mxu0
        %v1057 = vlaneseq
        %v1058 = vand.u32 %v1057, 127
        %vm1059 = vcmp.lt.s32.totalorder %v1058, 8
        %v1060 = vsel %vm1059, %v1054, -1e+30
        %1061 = vmax.xlane.f32.xlu0 %v1060
        %v1062 = vpop.xlane.xlu0 %1061
        %v1063 = vsub.f32 %v1060, %v1062
        %v1064 = vmul.f32 %v1063, 1.442695
        %v1065 = vpow.pop %v1064
        %1066 = vadd.xlane.f32.xlu0 %v1065
        %v1067 = vpop.xlane.xlu0 %1066
        %v1068 = vrcp.pop %v1067
        %v1069 = vmul.f32 %v1065, %v1068
        %1070 = vst [vmem:[%s460] sm:$0xff] %v1069
        %v1071 = vld [vmem:[#allocation3] sm:$0xff]
        %v1072 = vld [vmem:[#allocation3 + $0x8] sm:$0xff]
        %v1073 = vld [vmem:[#allocation3 + $0x10] sm:$0xff]
        %v1074 = vld [vmem:[#allocation3 + $0x18] sm:$0xff]
        %v1075 = vld [vmem:[#allocation3 + $0x20] sm:$0xff]
        %v1076 = vld [vmem:[#allocation3 + $0x28] sm:$0xff]
        %v1077 = vld [vmem:[#allocation3 + $0x30] sm:$0xff]
        %v1078 = vld [vmem:[#allocation3 + $0x38] sm:$0xff]
        %v1079 = vld [vmem:[#allocation3 + $0x40] sm:$0xff]
        %v1080 = vld [vmem:[#allocation3 + $0x48] sm:$0xff]
        %v1081 = vld [vmem:[#allocation3 + $0x50] sm:$0xff]
        %v1082 = vld [vmem:[#allocation3 + $0x58] sm:$0xff]
        %v1083 = vld [vmem:[#allocation3 + $0x60] sm:$0xff]
        %v1084 = vld [vmem:[#allocation3 + $0x68] sm:$0xff]
        %v1085 = vld [vmem:[#allocation3 + $0x70] sm:$0xff]
        %v1086 = vld [vmem:[#allocation3 + $0x78] sm:$0xff]
        %1087 = vmatprep.subr.mxu0 0.0
        %1088 = vmatpush1.msra.mxu0 %v1071
        %1089 = vmatprep.subr.mxu0 0.0
        %1090 = vmatpush1.msra.mxu0 %v1072
        %1091 = vmatprep.subr.mxu0 0.0
        %1092 = vmatpush1.msra.mxu0 %v1073
        %1093 = vmatprep.subr.mxu0 0.0
        %1094 = vmatpush1.msra.mxu0 %v1074
        %1095 = vmatprep.subr.mxu0 0.0
        %1096 = vmatpush1.msra.mxu0 %v1075
        %1097 = vmatprep.subr.mxu0 0.0
        %1098 = vmatpush1.msra.mxu0 %v1076
        %1099 = vmatprep.subr.mxu0 0.0
        %1100 = vmatpush1.msra.mxu0 %v1077
        %1101 = vmatprep.subr.mxu0 0.0
        %1102 = vmatpush1.msra.mxu0 %v1078
        %1103 = vmatprep.subr.mxu0 0.0
        %1104 = vmatpush1.msra.mxu0 %v1079
        %1105 = vmatprep.subr.mxu0 0.0
        %1106 = vmatpush1.msra.mxu0 %v1080
        %1107 = vmatprep.subr.mxu0 0.0
        %1108 = vmatpush1.msra.mxu0 %v1081
        %1109 = vmatprep.subr.mxu0 0.0
        %1110 = vmatpush1.msra.mxu0 %v1082
        %1111 = vmatprep.subr.mxu0 0.0
        %1112 = vmatpush1.msra.mxu0 %v1083
        %1113 = vmatprep.subr.mxu0 0.0
        %1114 = vmatpush1.msra.mxu0 %v1084
        %1115 = vmatprep.subr.mxu0 0.0
        %1116 = vmatpush1.msra.mxu0 %v1085
        %1117 = vmatprep.subr.mxu0 0.0
        %1118 = vmatpush1.msra.mxu0 %v1086
        %1119 = vmatprep.subr.mxu0 0.0
        %1120 = vmatpush1.msra.mxu0 0.0
        %1121 = vmatprep.subr.mxu0 0.0
        %1122 = vmatpush1.msra.mxu0 0.0
        %1123 = vmatprep.subr.mxu0 0.0
        %1124 = vmatpush1.msra.mxu0 0.0
        %1125 = vmatprep.subr.mxu0 0.0
        %1126 = vmatpush1.msra.mxu0 0.0
        %1127 = vmatprep.subr.mxu0 0.0
        %1128 = vmatpush1.msra.mxu0 0.0
        %1129 = vmatprep.subr.mxu0 0.0
        %1130 = vmatpush1.msra.mxu0 0.0
        %1131 = vmatprep.subr.mxu0 0.0
        %1132 = vmatpush1.msra.mxu0 0.0
        %1133 = vmatprep.subr.mxu0 0.0
        %1134 = vmatpush1.msra.mxu0 0.0
        %1135 = vmatprep.subr.mxu0 0.0
        %1136 = vmatpush1.msra.mxu0 0.0
        %1137 = vmatprep.subr.mxu0 0.0
        %1138 = vmatpush1.msra.mxu0 0.0
        %1139 = vmatprep.subr.mxu0 0.0
        %1140 = vmatpush1.msra.mxu0 0.0
        %1141 = vmatprep.subr.mxu0 0.0
        %1142 = vmatpush1.msra.mxu0 0.0
        %1143 = vmatprep.subr.mxu0 0.0
        %1144 = vmatpush1.msra.mxu0 0.0
        %1145 = vmatprep.subr.mxu0 0.0
        %1146 = vmatpush1.msra.mxu0 0.0
        %1147 = vmatprep.subr.mxu0 0.0
        %1148 = vmatpush1.msra.mxu0 0.0
        %1149 = vmatprep.subr.mxu0 0.0
        %1150 = vmatpush1.msra.mxu0 0.0
        %1151 = vmatprep.mubr.f32.mxu0 0.0
        %1152 = vmatmul.mubr.f32.gmra.mrb[0].mxu0 %v1069
        %v1153 = vpop.f32.mrb[0].mxu0
        %v1154 = vadd.f32 0.0, %v1153
        %v1155 = vpop.f32.mrb[0].mxu0
        %1156 = vdwg.mxu0
        %1157 = vst [vmem:[%s453] sm:$0xff] %v1154
        %s1158 = sand.u32 %s236, 1
        %s1159 = scalar_lea.sflag [#allocation6], %s1158
        %s1160 = sand.u32 %s236, 1
        %s1161 = smul.addr %s1160, 8
        %s1162 = scalar_lea.vmem [#allocation13], %s1161
        %s1163 = sand.u32 %s264, 1
        %s1164 = scalar_lea.sflag [#allocation15], %s1163
        %s1165 = sand.u32 %s264, 1
        %s1166 = smul.addr %s1165, 8
        %s1167 = scalar_lea.vmem [#allocation14], %s1166
        // Predicated region
        $region73: #{tpu_custom_call.1} parent=51 // pred_check
          %p1168 = pneg %p246
        $region74: #{tpu_custom_call.1} parent=51 // pred_check_branch
          %1170 = sbr.rel (%p1168) target = $region76
        $region75: #{tpu_custom_call.1} parent=51 // pred_region
          %s1172 = ssub.s32 128, 128
          %1173 = vsyncadd %s1159, %s1172
          %s1174 = sadd.s32 %s39, %s38
          %s1175 = smul.addr %s1174, 128
          %s1176 = scalar_lea.hbm %s8, %s1175
          %s1178 = sshll.u32 %s1162, 4
          %s1179 = int_to_ptr.vmem [resolvable:$true] %s1178
          %1181 = dma.vmem_to_hbm [thread:$0]  %s1179, 128, %s1176, %s1159
        $region76: #{tpu_custom_call.1} parent=51 // pred_fallthru
          _
        // Predicated region
        $region77: #{tpu_custom_call.1} parent=51 // pred_check
          %p1182 = pneg %p274
        $region78: #{tpu_custom_call.1} parent=51 // pred_check_branch
          %1184 = sbr.rel (%p1182) target = $region80
        $region79: #{tpu_custom_call.1} parent=51 // pred_region
          %s1186 = ssub.s32 128, 128
          %1187 = vsyncadd %s1164, %s1186
          %s1188 = sadd.s32 %s39, %s38
          %s1189 = smul.addr %s1188, 128
          %s1190 = scalar_lea.hbm %s9, %s1189
          %s1192 = sshll.u32 %s1167, 4
          %s1193 = int_to_ptr.vmem [resolvable:$true] %s1192
          %1195 = dma.vmem_to_hbm [thread:$0]  %s1193, 128, %s1190, %s1164
        $region80: #{tpu_custom_call.1} parent=51 // pred_fallthru
          _
      $region52: #{tpu_custom_call.1} parent=5 // pred_fallthru
        _
      %p1196 = scmp.le.s32.totalorder 2, %s29
      // Predicated region
      $region81: #{tpu_custom_call.1} parent=5 // pred_check
        %p1197 = pneg %p1196
      $region82: #{tpu_custom_call.1} parent=5 // pred_check_branch
        %1199 = sbr.rel (%p1197) target = $region84
      $region83: #{tpu_custom_call.1} parent=5 // pred_region
        %s1200 = ssub.s32 %s29, 2
        // Predicated region
        $region85: #{tpu_custom_call.1} parent=83 // pred_check
          %p1201 = pneg %p252
        $region86: #{tpu_custom_call.1} parent=83 // pred_check_branch
          %1203 = sbr.rel (%p1201) target = $region88
        $region87: #{tpu_custom_call.1} parent=83 // pred_region
          %s1204 = sand.u32 %s237, 1
          %s1205 = scalar_lea.sflag [#allocation6], %s1204
          %s1206 = sand.u32 %s237, 1
          %s1207 = smul.addr %s1206, 8
          %s1208 = scalar_lea.vmem [#allocation13], %s1207
          %1209 = dma.done %s1205, 128
        $region88: #{tpu_custom_call.1} parent=83 // pred_fallthru
          _
        // Predicated region
        $region89: #{tpu_custom_call.1} parent=83 // pred_check
          %p1210 = pneg %p280
        $region90: #{tpu_custom_call.1} parent=83 // pred_check_branch
          %1212 = sbr.rel (%p1210) target = $region92
        $region91: #{tpu_custom_call.1} parent=83 // pred_region
          %s1213 = sand.u32 %s265, 1
          %s1214 = scalar_lea.sflag [#allocation15], %s1213
          %s1215 = sand.u32 %s265, 1
          %s1216 = smul.addr %s1215, 8
          %s1217 = scalar_lea.vmem [#allocation14], %s1216
          %1218 = dma.done %s1214, 128
        $region92: #{tpu_custom_call.1} parent=83 // pred_fallthru
          _
      $region84: #{tpu_custom_call.1} parent=5 // pred_fallthru
        _
    $region6: #{tpu_custom_call.1} parent=1 // loop_footer
      %s33 = sadd.s32 1, %s29
    $region7: #{tpu_custom_call.1} parent=1 // loop_footer_branch
      %28 = sbr.rel target = $region3
    $region8: #{tpu_custom_call.1} parent=1 // loop_exit
      _
    %1219 = vsyncpa [#allocation5], 1
    %s1220 = scalar_lea.sflag [#allocation5], 1
    %1221 = vsyncpa %s1220, 1
    %1222 = vsyncpa [#allocation8], 1
    %s1223 = scalar_lea.sflag [#allocation8], 1
    %1224 = vsyncpa %s1223, 1
    %1225 = vsyncpa [#allocation11], 1
    %1226 = vsyncpa [#allocation6], 1
    %s1227 = scalar_lea.sflag [#allocation6], 1
    %1228 = vsyncpa %s1227, 1
    %1229 = vsyncpa [#allocation15], 1
    %s1230 = scalar_lea.sflag [#allocation15], 1
    %1231 = vsyncpa %s1230, 1

</llo_original>
